<compile_context>
chip_gen: v7x
topology: tpu7x:2x2x1
jax: 0.10.0
libtpu: 0.0.40
codegen_flags: <defaults>
</compile_context>

<pallas_src>
import functools
import math

import jax
import jax.numpy as jnp
from jax.experimental import pallas as pl
from jax.experimental.pallas import tpu as pltpu


# ----------------------------- Pallas kernel -----------------------------

def _self_attn_kernel(v_in_ref, k_in_ref, q_in_ref, mask_ref,
                      wvkq_ref, bvkq_ref, wo_ref, bo_ref, o_ref,
                      *, heads, scale, precise):
    """Fused multi-head attention for one (batch, query-tile) grid step.

    v_in / k_in : (1, L, E)   f32 activations
    q_in        : (1, tq, E)  f32 activations
    mask        : (1, tq, Lk) int8, nonzero = attend, 0 = masked (-1e20 fill)
    wvkq        : (3, H, E, D) bf16  per-head stacked [Wv, Wk, Wq]
    bvkq        : (3, H, 1, D) f32   per-head stacked [bv, bk, bq]
    wo          : (H, D, E)   bf16   per-head slices of the output projection
    bo          : (1, E)      f32
    o           : (1, tq, E)  f32
    """
    f32, bf16 = jnp.float32, jnp.bfloat16
    H = heads

    v_in = v_in_ref[0].astype(bf16)          # (Lv, E)
    k_in = k_in_ref[0].astype(bf16)          # (Lk, E)
    q_in = q_in_ref[0].astype(bf16)          # (tq, E)
    Lv, E = v_in.shape
    Lk = k_in.shape[0]
    tq = q_in.shape[0]

    # Heads as a leading batch axis: every matmul below is ONE head-batched MXU op.
    v_b = jnp.broadcast_to(v_in, (H, Lv, E))
    k_b = jnp.broadcast_to(k_in, (H, Lk, E))
    q_b = jnp.broadcast_to(q_in, (H, tq, E))

    # Per-head projections (bf16 MXU inputs, f32 accumulation).  Same total FLOPs as
    # the fused (L,E)@(E,E) projections since the per-head weight slabs are disjoint.
    vh = jnp.einsum('hle,hed->hld', v_b, wvkq_ref[0], preferred_element_type=f32) + bvkq_ref[0]
    kh = jnp.einsum('hle,hed->hld', k_b, wvkq_ref[1], preferred_element_type=f32) + bvkq_ref[1]
    qh = jnp.einsum('hle,hed->hld', q_b, wvkq_ref[2], preferred_element_type=f32) + bvkq_ref[2]
    qh = qh * scale                          # 1/sqrt(E): one VPU mul, hidden under MXU

    # energy (H, tq, Lk) = per-head q @ k^T, one batched MXU op.
    e = jnp.einsum('hqd,hkd->hqk', qh.astype(bf16), kh.astype(bf16),
                   preferred_element_type=f32)
    keep = mask_ref[0] != 0                  # (tq, Lk) int8 -> bool
    e = jnp.where(keep[None, :, :], e, jnp.float32(-1e20))

    # Softmax over keys, kept in f32 on the VPU/EUP.
    m = jnp.max(e, axis=-1, keepdims=True)
    p = jnp.exp(e - m)
    denom = jnp.sum(p, axis=-1, keepdims=True)
    if precise:
        a = p / denom
    else:
        a = p * pl.reciprocal(denom, approx=True)   # EUP slot, ~free

    # context (H, tq, D) = attn @ v, one batched MXU op.
    ctx = jnp.einsum('hqk,hkd->hqd', a.astype(bf16), vh.astype(bf16),
                     preferred_element_type=f32)

    # Output projection folded per head as ONE batched MXU op + cheap head reduction:
    #   sum_h ctx_h @ Wo[h*D:(h+1)*D, :]  ==  concat_h(ctx_h) @ Wo
    out = jnp.einsum('hqd,hde->hqe', ctx.astype(bf16), wo_ref[...],
                     preferred_element_type=f32)
    o_ref[0] = jnp.sum(out, axis=0) + bo_ref[...]


# ----------------------------- parameter preparation (runs ONCE) -----------------------------

def prepare_params(params, *, heads):
    """Restructure/cast the projection weights once (not per call)."""
    E = params["wq"].shape[0]
    D = E // heads
    assert D * heads == E

    def per_head_w(w):     # (E, E) -> (H, E, D), head h = output columns [h*D, (h+1)*D)
        return jnp.transpose(w.reshape(E, heads, D), (1, 0, 2)).astype(jnp.bfloat16)

    def per_head_b(b):     # (E,) -> (H, 1, D)
        return b.reshape(heads, 1, D).astype(jnp.float32)

    return dict(
        wvkq=jnp.stack([per_head_w(params["wv"]),
                        per_head_w(params["wk"]),
                        per_head_w(params["wq"])], axis=0),    # (3, H, E, D) bf16
        bvkq=jnp.stack([per_head_b(params["bv"]),
                        per_head_b(params["bk"]),
                        per_head_b(params["bq"])], axis=0),    # (3, H, 1, D) f32
        wo_h=params["wo"].reshape(heads, D, E).astype(jnp.bfloat16),   # (H, D, E) bf16
        bo=params["bo"].reshape(1, E).astype(jnp.float32),             # (1, E) f32
    )


def _prepare_mask(mask, N, Lq, Lk, heads):
    """PyTorch masked_fill broadcast semantics, compacted to an (N, Lq, Lk) int8 slab."""
    if mask is None:
        return jnp.ones((N, Lq, Lk), jnp.int8)
    if mask.ndim == 4:
        if mask.shape[1] != 1:
            # TODO(synk): per-head masks (mask.shape[1] == heads) would need a head axis
            # through HBM and in the kernel's jnp.where.
            raise NotImplementedError("per-head masks are not supported")
        m = jnp.broadcast_to(mask, (N, 1, Lq, Lk)).reshape(N, Lq, Lk)
    else:
        m = jnp.broadcast_to(mask, (N, Lq, Lk))
    return (m != 0).astype(jnp.int8)


# ----------------------------- wrapper -----------------------------

def self_attn(prepared, values, keys, query, mask, *, heads, block_q=128, precise=False):
    """Matches PyTorch SelfAttn.forward(values, keys, query, mask)."""
    N, Lv, E = values.shape
    Lk = keys.shape[1]
    Lq = query.shape[1]
    D = E // heads
    assert D * heads == E
    scale = 1.0 / math.sqrt(E)

    tq = min(block_q, Lq)
    assert Lq % tq == 0, "query length must be divisible by the query tile"
    grid = (N, Lq // tq)

    mask_b = _prepare_mask(mask, N, Lq, Lk, heads)   # (N, Lq, Lk) int8

    kernel = functools.partial(_self_attn_kernel, heads=heads, scale=scale,
                               precise=precise)
    return pl.pallas_call(
        kernel,
        out_shape=jax.ShapeDtypeStruct((N, Lq, E), jnp.float32),
        grid=grid,
        in_specs=[
            pl.BlockSpec((1, Lv, E), lambda n, qi: (n, 0, 0)),            # values
            pl.BlockSpec((1, Lk, E), lambda n, qi: (n, 0, 0)),            # keys
            pl.BlockSpec((1, tq, E), lambda n, qi: (n, qi, 0)),           # query tile
            pl.BlockSpec((1, tq, Lk), lambda n, qi: (n, qi, 0)),          # mask tile (int8)
            pl.BlockSpec((3, heads, E, D), lambda n, qi: (0, 0, 0, 0)),   # Wv/Wk/Wq per head
            pl.BlockSpec((3, heads, 1, D), lambda n, qi: (0, 0, 0, 0)),   # bv/bk/bq per head
            pl.BlockSpec((heads, D, E), lambda n, qi: (0, 0, 0)),         # Wo per head
            pl.BlockSpec((1, E), lambda n, qi: (0, 0)),                   # bo
        ],
        out_specs=pl.BlockSpec((1, tq, E), lambda n, qi: (n, qi, 0)),
        compiler_params=pltpu.CompilerParams(
            dimension_semantics=("parallel", "parallel")),
    )(values, keys, query, mask_b,
      prepared["wvkq"], prepared["bvkq"], prepared["wo_h"], prepared["bo"])


# ----------------------------- pure-JAX reference (correctness check) -----------------------------

def self_attn_reference(params, values, keys, query, mask, *, heads):
    N, Lq, E = query.shape
    D = E // heads
    v = values @ params["wv"] + params["bv"]
    k = keys @ params["wk"] + params["bk"]
    q = query @ params["wq"] + params["bq"]
    v = v.reshape(N, -1, heads, D)
    k = k.reshape(N, -1, heads, D)
    q = q.reshape(N, Lq, heads, D)
    energy = jnp.einsum('nqhd,nkhd->nhqk', q, k)
    if mask is not None:
        energy = jnp.where(mask == 0, jnp.float32(-1e20), energy)
    attn = jax.nn.softmax(energy / math.sqrt(E), axis=3)
    out = jnp.einsum('nhqk,nkhd->nqhd', attn, v).reshape(N, Lq, E)
    return out @ params["wo"] + params["bo"]


# ----------------------------- deterministic params -----------------------------

def init_params(key, E):
    keys = iter(jax.random.split(key, 16))

    def lin(fan_in, fan_out):
        # Weights stored as (in, out); y = x @ W + b (== torch x @ W.T + b).
        w = jax.random.normal(next(keys), (fan_in, fan_out), jnp.float32) * 0.02
        b = jax.random.normal(next(keys), (fan_out,), jnp.float32) * 0.02
        return w, b

    wv, bv = lin(E, E)
    wk, bk = lin(E, E)
    wq, bq = lin(E, E)
    wo, bo = lin(E, E)
    return dict(wv=wv, bv=bv, wk=wk, bk=bk, wq=wq, bq=bq, wo=wo, bo=bo)


# ----------------------------- main -----------------------------

if __name__ == "__main__":
    N, seq_len = 2, 8
    E, heads = 32, 4

    root = jax.random.PRNGKey(0)
    pkey, xkey = jax.random.split(root)
    params = init_params(pkey, E)
    prepared = prepare_params(params, heads=heads)     # weight restructuring runs once

    k0, k1, k2 = jax.random.split(xkey, 3)
    values = jax.random.normal(k0, (N, seq_len, E), jnp.float32)
    keys_in = jax.random.normal(k1, (N, seq_len, E), jnp.float32)
    query = jax.random.normal(k2, (N, seq_len, E), jnp.float32)
    # causal mask, PyTorch-style (1, 1, Lq, Lk); 1 = attend, 0 = masked
    mask = jnp.tril(jnp.ones((seq_len, seq_len), jnp.float32))[None, None]

    out = self_attn(prepared, values, keys_in, query, mask, heads=heads)
    out = jax.block_until_ready(out)
    assert out.shape == (N, seq_len, E) and out.dtype == jnp.float32

    ref = self_attn_reference(params, values, keys_in, query, mask, heads=heads)
    assert jnp.allclose(out, ref, rtol=2e-2, atol=2e-2), "mismatch vs reference"

    print("KERNEL_OK")
</pallas_src>

<mosaic_0001>
module attributes {stable_mosaic.version = 11 : i64} {
  func.func @_self_attn_kernel(%arg0: i32, %arg1: i32, %arg2: memref<1x8x32xf32, #tpu.memory_space<vmem>>, %arg3: memref<1x8x32xf32, #tpu.memory_space<vmem>>, %arg4: memref<1x8x32xf32, #tpu.memory_space<vmem>>, %arg5: memref<1x8x8xi8, #tpu.memory_space<vmem>>, %arg6: memref<3x4x32x8xbf16, #tpu.memory_space<vmem>>, %arg7: memref<3x4x1x8xf32, #tpu.memory_space<vmem>>, %arg8: memref<4x8x32xbf16, #tpu.memory_space<vmem>>, %arg9: memref<1x32xf32, #tpu.memory_space<vmem>>, %arg10: memref<1x8x32xf32, #tpu.memory_space<vmem>>) attributes {dimension_semantics = [#tpu.dimension_semantics<parallel>, #tpu.dimension_semantics<parallel>], iteration_bounds = array<i64: 2, 1>, scalar_prefetch = 0 : i64, scratch_operands = 0 : i64, tpu.core_type = #tpu.core_type<tc>, window_params = [{transform_indices = @transform_0, window_bounds = array<i64: 1, 8, 32>}, {transform_indices = @transform_1, window_bounds = array<i64: 1, 8, 32>}, {transform_indices = @transform_2, window_bounds = array<i64: 1, 8, 32>}, {transform_indices = @transform_3, window_bounds = array<i64: 1, 8, 8>}, {pipeline_mode = #tpu.pipeline_mode<synchronous>, transform_indices = @transform_4, window_bounds = array<i64: 3, 4, 32, 8>}, {pipeline_mode = #tpu.pipeline_mode<synchronous>, transform_indices = @transform_5, window_bounds = array<i64: 3, 4, 1, 8>}, {pipeline_mode = #tpu.pipeline_mode<synchronous>, transform_indices = @transform_6, window_bounds = array<i64: 4, 8, 32>}, {pipeline_mode = #tpu.pipeline_mode<synchronous>, transform_indices = @transform_7, window_bounds = array<i64: 1, 32>}, {transform_indices = @transform_8, window_bounds = array<i64: 1, 8, 32>}]} {
    %c0 = arith.constant 0 : index
    %c0_0 = arith.constant 0 : index
    %c0_1 = arith.constant 0 : index
    %0 = vector.load %arg2[%c0, %c0_0, %c0_1] : memref<1x8x32xf32, #tpu.memory_space<vmem>>, vector<1x8x32xf32>
    %1 = vector.shape_cast %0 : vector<1x8x32xf32> to vector<8x32xf32>
    %2 = arith.truncf %1 : vector<8x32xf32> to vector<8x32xbf16>
    %c0_2 = arith.constant 0 : index
    %c0_3 = arith.constant 0 : index
    %c0_4 = arith.constant 0 : index
    %3 = vector.load %arg3[%c0_2, %c0_3, %c0_4] : memref<1x8x32xf32, #tpu.memory_space<vmem>>, vector<1x8x32xf32>
    %4 = vector.shape_cast %3 : vector<1x8x32xf32> to vector<8x32xf32>
    %5 = arith.truncf %4 : vector<8x32xf32> to vector<8x32xbf16>
    %c0_5 = arith.constant 0 : index
    %c0_6 = arith.constant 0 : index
    %c0_7 = arith.constant 0 : index
    %6 = vector.load %arg4[%c0_5, %c0_6, %c0_7] : memref<1x8x32xf32, #tpu.memory_space<vmem>>, vector<1x8x32xf32>
    %7 = vector.shape_cast %6 : vector<1x8x32xf32> to vector<8x32xf32>
    %8 = arith.truncf %7 : vector<8x32xf32> to vector<8x32xbf16>
    %9 = vector.shape_cast %2 : vector<8x32xbf16> to vector<1x8x32xbf16>
    %10 = vector.broadcast %9 : vector<1x8x32xbf16> to vector<4x8x32xbf16>
    %11 = vector.shape_cast %5 : vector<8x32xbf16> to vector<1x8x32xbf16>
    %12 = vector.broadcast %11 : vector<1x8x32xbf16> to vector<4x8x32xbf16>
    %13 = vector.shape_cast %8 : vector<8x32xbf16> to vector<1x8x32xbf16>
    %14 = vector.broadcast %13 : vector<1x8x32xbf16> to vector<4x8x32xbf16>
    %c0_8 = arith.constant 0 : index
    %c0_9 = arith.constant 0 : index
    %c0_10 = arith.constant 0 : index
    %c0_11 = arith.constant 0 : index
    %15 = vector.load %arg6[%c0_8, %c0_9, %c0_10, %c0_11] : memref<3x4x32x8xbf16, #tpu.memory_space<vmem>>, vector<1x4x32x8xbf16>
    %16 = vector.shape_cast %15 : vector<1x4x32x8xbf16> to vector<4x32x8xbf16>
    "tpu.trace_start"() <{level = 10 : i32, message = "hle,hed->hld"}> : () -> ()
    %cst = arith.constant dense<0.000000e+00> : vector<4x8x8xf32>
    %17 = tpu.matmul %10, %16, %cst {dimension_numbers = #tpu.dot_dimension_numbers<[2], [1], [1], [2], [0, 0, 0, 1, 1, 2], [0], [0]>} : vector<4x8x32xbf16>, vector<4x32x8xbf16>, vector<4x8x8xf32> -> vector<4x8x8xf32>
    "tpu.trace_stop"() : () -> ()
    %c0_12 = arith.constant 0 : index
    %c0_13 = arith.constant 0 : index
    %c0_14 = arith.constant 0 : index
    %c0_15 = arith.constant 0 : index
    %18 = vector.load %arg7[%c0_12, %c0_13, %c0_14, %c0_15] : memref<3x4x1x8xf32, #tpu.memory_space<vmem>>, vector<1x4x1x8xf32>
    %19 = vector.shape_cast %18 : vector<1x4x1x8xf32> to vector<4x1x8xf32>
    %20 = vector.broadcast %19 : vector<4x1x8xf32> to vector<4x8x8xf32>
    %21 = arith.addf %17, %20 : vector<4x8x8xf32>
    %c1 = arith.constant 1 : index
    %c0_16 = arith.constant 0 : index
    %c0_17 = arith.constant 0 : index
    %c0_18 = arith.constant 0 : index
    %22 = vector.load %arg6[%c1, %c0_16, %c0_17, %c0_18] : memref<3x4x32x8xbf16, #tpu.memory_space<vmem>>, vector<1x4x32x8xbf16>
    %23 = vector.shape_cast %22 : vector<1x4x32x8xbf16> to vector<4x32x8xbf16>
    "tpu.trace_start"() <{level = 10 : i32, message = "hle,hed->hld"}> : () -> ()
    %cst_19 = arith.constant dense<0.000000e+00> : vector<4x8x8xf32>
    %24 = tpu.matmul %12, %23, %cst_19 {dimension_numbers = #tpu.dot_dimension_numbers<[2], [1], [1], [2], [0, 0, 0, 1, 1, 2], [0], [0]>} : vector<4x8x32xbf16>, vector<4x32x8xbf16>, vector<4x8x8xf32> -> vector<4x8x8xf32>
    "tpu.trace_stop"() : () -> ()
    %c1_20 = arith.constant 1 : index
    %c0_21 = arith.constant 0 : index
    %c0_22 = arith.constant 0 : index
    %c0_23 = arith.constant 0 : index
    %25 = vector.load %arg7[%c1_20, %c0_21, %c0_22, %c0_23] : memref<3x4x1x8xf32, #tpu.memory_space<vmem>>, vector<1x4x1x8xf32>
    %26 = vector.shape_cast %25 : vector<1x4x1x8xf32> to vector<4x1x8xf32>
    %27 = vector.broadcast %26 : vector<4x1x8xf32> to vector<4x8x8xf32>
    %28 = arith.addf %24, %27 : vector<4x8x8xf32>
    %c2 = arith.constant 2 : index
    %c0_24 = arith.constant 0 : index
    %c0_25 = arith.constant 0 : index
    %c0_26 = arith.constant 0 : index
    %29 = vector.load %arg6[%c2, %c0_24, %c0_25, %c0_26] : memref<3x4x32x8xbf16, #tpu.memory_space<vmem>>, vector<1x4x32x8xbf16>
    %30 = vector.shape_cast %29 : vector<1x4x32x8xbf16> to vector<4x32x8xbf16>
    "tpu.trace_start"() <{level = 10 : i32, message = "hle,hed->hld"}> : () -> ()
    %cst_27 = arith.constant dense<0.000000e+00> : vector<4x8x8xf32>
    %31 = tpu.matmul %14, %30, %cst_27 {dimension_numbers = #tpu.dot_dimension_numbers<[2], [1], [1], [2], [0, 0, 0, 1, 1, 2], [0], [0]>} : vector<4x8x32xbf16>, vector<4x32x8xbf16>, vector<4x8x8xf32> -> vector<4x8x8xf32>
    "tpu.trace_stop"() : () -> ()
    %c2_28 = arith.constant 2 : index
    %c0_29 = arith.constant 0 : index
    %c0_30 = arith.constant 0 : index
    %c0_31 = arith.constant 0 : index
    %32 = vector.load %arg7[%c2_28, %c0_29, %c0_30, %c0_31] : memref<3x4x1x8xf32, #tpu.memory_space<vmem>>, vector<1x4x1x8xf32>
    %33 = vector.shape_cast %32 : vector<1x4x1x8xf32> to vector<4x1x8xf32>
    %34 = vector.broadcast %33 : vector<4x1x8xf32> to vector<4x8x8xf32>
    %35 = arith.addf %31, %34 : vector<4x8x8xf32>
    %cst_32 = arith.constant 0.176776692 : f32
    %36 = vector.broadcast %cst_32 : f32 to vector<4x8x8xf32>
    %37 = arith.mulf %35, %36 : vector<4x8x8xf32>
    %38 = arith.truncf %37 : vector<4x8x8xf32> to vector<4x8x8xbf16>
    %39 = arith.truncf %28 : vector<4x8x8xf32> to vector<4x8x8xbf16>
    "tpu.trace_start"() <{level = 10 : i32, message = "hqd,hkd->hqk"}> : () -> ()
    %cst_33 = arith.constant dense<0.000000e+00> : vector<4x8x8xf32>
    %40 = tpu.matmul %38, %39, %cst_33 {dimension_numbers = #tpu.dot_dimension_numbers<[2], [2], [1], [1], [0, 0, 0, 1, 1, 1], [0], [0]>} : vector<4x8x8xbf16>, vector<4x8x8xbf16>, vector<4x8x8xf32> -> vector<4x8x8xf32>
    "tpu.trace_stop"() : () -> ()
    %c0_34 = arith.constant 0 : index
    %c0_35 = arith.constant 0 : index
    %c0_36 = arith.constant 0 : index
    %41 = vector.load %arg5[%c0_34, %c0_35, %c0_36] : memref<1x8x8xi8, #tpu.memory_space<vmem>>, vector<1x8x8xi8>
    %42 = vector.shape_cast %41 : vector<1x8x8xi8> to vector<8x8xi8>
    %c0_i8 = arith.constant 0 : i8
    %43 = vector.broadcast %c0_i8 : i8 to vector<8x8xi8>
    %44 = arith.cmpi ne, %42, %43 : vector<8x8xi8>
    %45 = vector.shape_cast %44 : vector<8x8xi1> to vector<1x8x8xi1>
    %cst_37 = arith.constant -1.000000e+20 : f32
    %46 = vector.shape_cast %45 : vector<1x8x8xi1> to vector<1x8x8xi1>
    %47 = vector.broadcast %46 : vector<1x8x8xi1> to vector<4x8x8xi1>
    %48 = vector.broadcast %cst_37 : f32 to vector<4x8x8xf32>
    %49 = arith.select %47, %40, %48 : vector<4x8x8xi1>, vector<4x8x8xf32>
    %cst_38 = arith.constant dense<0xFF800000> : vector<4x8xf32>
    %50 = vector.multi_reduction <maximumf>, %49, %cst_38 [2] : vector<4x8x8xf32> to vector<4x8xf32>
    %51 = vector.shape_cast %50 : vector<4x8xf32> to vector<4x8x1xf32>
    %52 = vector.broadcast %51 : vector<4x8x1xf32> to vector<4x8x8xf32>
    %53 = arith.subf %49, %52 : vector<4x8x8xf32>
    %54 = math.exp %53 : vector<4x8x8xf32>
    %cst_39 = arith.constant dense<0.000000e+00> : vector<4x8xf32>
    %55 = vector.multi_reduction <add>, %54, %cst_39 [2] : vector<4x8x8xf32> to vector<4x8xf32>
    %56 = vector.shape_cast %55 : vector<4x8xf32> to vector<4x8x1xf32>
    %57 = tpu.reciprocal %56 {approx = true} : vector<4x8x1xf32> -> vector<4x8x1xf32>
    %58 = vector.broadcast %57 : vector<4x8x1xf32> to vector<4x8x8xf32>
    %59 = arith.mulf %54, %58 : vector<4x8x8xf32>
    %60 = arith.truncf %59 : vector<4x8x8xf32> to vector<4x8x8xbf16>
    %61 = arith.truncf %21 : vector<4x8x8xf32> to vector<4x8x8xbf16>
    "tpu.trace_start"() <{level = 10 : i32, message = "hqk,hkd->hqd"}> : () -> ()
    %cst_40 = arith.constant dense<0.000000e+00> : vector<4x8x8xf32>
    %62 = tpu.matmul %60, %61, %cst_40 {dimension_numbers = #tpu.dot_dimension_numbers<[2], [1], [1], [2], [0, 0, 0, 1, 1, 2], [0], [0]>} : vector<4x8x8xbf16>, vector<4x8x8xbf16>, vector<4x8x8xf32> -> vector<4x8x8xf32>
    "tpu.trace_stop"() : () -> ()
    %63 = arith.truncf %62 : vector<4x8x8xf32> to vector<4x8x8xbf16>
    %c0_41 = arith.constant 0 : index
    %c0_42 = arith.constant 0 : index
    %c0_43 = arith.constant 0 : index
    %64 = vector.load %arg8[%c0_41, %c0_42, %c0_43] : memref<4x8x32xbf16, #tpu.memory_space<vmem>>, vector<4x8x32xbf16>
    "tpu.trace_start"() <{level = 10 : i32, message = "hqd,hde->hqe"}> : () -> ()
    %cst_44 = arith.constant dense<0.000000e+00> : vector<4x8x32xf32>
    %65 = tpu.matmul %63, %64, %cst_44 {dimension_numbers = #tpu.dot_dimension_numbers<[2], [1], [1], [2], [0, 0, 0, 1, 1, 2], [0], [0]>} : vector<4x8x8xbf16>, vector<4x8x32xbf16>, vector<4x8x32xf32> -> vector<4x8x32xf32>
    "tpu.trace_stop"() : () -> ()
    %cst_45 = arith.constant dense<0.000000e+00> : vector<8x32xf32>
    %66 = vector.multi_reduction <add>, %65, %cst_45 [0] : vector<4x8x32xf32> to vector<8x32xf32>
    %c0_46 = arith.constant 0 : index
    %c0_47 = arith.constant 0 : index
    %67 = vector.load %arg9[%c0_46, %c0_47] : memref<1x32xf32, #tpu.memory_space<vmem>>, vector<1x32xf32>
    %68 = vector.broadcast %67 : vector<1x32xf32> to vector<8x32xf32>
    %69 = arith.addf %66, %68 : vector<8x32xf32>
    %c0_48 = arith.constant 0 : index
    %c0_49 = arith.constant 0 : index
    %c0_50 = arith.constant 0 : index
    %70 = vector.load %arg10[%c0_48, %c0_49, %c0_50] : memref<1x8x32xf32, #tpu.memory_space<vmem>>, vector<1x8x32xf32>
    %71 = vector.shape_cast %70 : vector<1x8x32xf32> to vector<8x32xf32>
    %72 = vector.shape_cast %69 : vector<8x32xf32> to vector<1x8x32xf32>
    tpu.vector_store %arg10[%c0_48, %c0_49, %c0_50], %72 {strides = array<i32>} : memref<1x8x32xf32, #tpu.memory_space<vmem>>, vector<1x8x32xf32>,
    return
  }
  func.func @transform_0(%arg0: i32, %arg1: i32) -> (i32, i32, i32) {
    %c0_i32 = arith.constant 0 : i32
    %c0_i32_0 = arith.constant 0 : i32
    %c0_i32_1 = arith.constant 0 : i32
    return %arg0, %c0_i32, %c0_i32_0 : i32, i32, i32
  }
  func.func @transform_1(%arg0: i32, %arg1: i32) -> (i32, i32, i32) {
    %c0_i32 = arith.constant 0 : i32
    %c0_i32_0 = arith.constant 0 : i32
    %c0_i32_1 = arith.constant 0 : i32
    return %arg0, %c0_i32, %c0_i32_0 : i32, i32, i32
  }
  func.func @transform_2(%arg0: i32, %arg1: i32) -> (i32, i32, i32) {
    %c0_i32 = arith.constant 0 : i32
    %c0_i32_0 = arith.constant 0 : i32
    return %arg0, %arg1, %c0_i32 : i32, i32, i32
  }
  func.func @transform_3(%arg0: i32, %arg1: i32) -> (i32, i32, i32) {
    %c0_i32 = arith.constant 0 : i32
    %c0_i32_0 = arith.constant 0 : i32
    return %arg0, %arg1, %c0_i32 : i32, i32, i32
  }
  func.func @transform_4(%arg0: i32, %arg1: i32) -> (i32, i32, i32, i32) {
    %c0_i32 = arith.constant 0 : i32
    %c0_i32_0 = arith.constant 0 : i32
    %c0_i32_1 = arith.constant 0 : i32
    %c0_i32_2 = arith.constant 0 : i32
    %c0_i32_3 = arith.constant 0 : i32
    return %c0_i32, %c0_i32_0, %c0_i32_1, %c0_i32_2 : i32, i32, i32, i32
  }
  func.func @transform_5(%arg0: i32, %arg1: i32) -> (i32, i32, i32, i32) {
    %c0_i32 = arith.constant 0 : i32
    %c0_i32_0 = arith.constant 0 : i32
    %c0_i32_1 = arith.constant 0 : i32
    %c0_i32_2 = arith.constant 0 : i32
    %c0_i32_3 = arith.constant 0 : i32
    return %c0_i32, %c0_i32_0, %c0_i32_1, %c0_i32_2 : i32, i32, i32, i32
  }
  func.func @transform_6(%arg0: i32, %arg1: i32) -> (i32, i32, i32) {
    %c0_i32 = arith.constant 0 : i32
    %c0_i32_0 = arith.constant 0 : i32
    %c0_i32_1 = arith.constant 0 : i32
    %c0_i32_2 = arith.constant 0 : i32
    return %c0_i32, %c0_i32_0, %c0_i32_1 : i32, i32, i32
  }
  func.func @transform_7(%arg0: i32, %arg1: i32) -> (i32, i32) {
    %c0_i32 = arith.constant 0 : i32
    %c0_i32_0 = arith.constant 0 : i32
    %c0_i32_1 = arith.constant 0 : i32
    return %c0_i32, %c0_i32_0 : i32, i32
  }
  func.func @transform_8(%arg0: i32, %arg1: i32) -> (i32, i32, i32) {
    %c0_i32 = arith.constant 0 : i32
    %c0_i32_0 = arith.constant 0 : i32
    return %arg0, %arg1, %c0_i32 : i32, i32, i32
  }
}

</mosaic_0001>

<llo_original>
// kernel: tpu_custom_call.1
$region0: #{tpu_custom_call.1}
  #allocation0 [shape = 'u32[]', space=smem, size = 0x4, offset = 0x4, fixed_abs, tag = 'smem constant byte address 0x4 - core index']
  #allocation1 [shape = 'u32[144,128]{1,0:T(1,128)}', space=vmem, size = 0x12000, scoped, tag = 'internal scratch']
  %s0 = inlined_call_operand.vmem [shape: f32[2,8,32], index: 0, kind: input, shape index: {}]
  %s1 = inlined_call_operand.vmem [shape: f32[2,8,32], index: 1, kind: input, shape index: {}]
  %s2 = inlined_call_operand.vmem [shape: f32[2,8,32], index: 2, kind: input, shape index: {}]
  %s3 = inlined_call_operand.vmem [shape: s8[2,8,8], index: 3, kind: input, shape index: {}]
  %s4 = inlined_call_operand.vmem [shape: bf16[3,4,32,8], index: 4, kind: input, shape index: {}]
  %s5 = inlined_call_operand.vmem [shape: f32[3,4,1,8], index: 5, kind: input, shape index: {}]
  %s6 = inlined_call_operand.vmem [shape: bf16[4,8,32], index: 6, kind: input, shape index: {}]
  %s7 = inlined_call_operand.vmem [shape: f32[1,32], index: 7, kind: input, shape index: {}]
  %s8 = inlined_call_operand.hbm [shape: f32[2,8,32], index: 8, kind: output, shape index: {}]
  %s9 = sld [smem:[#allocation0]]
  $region65: #{tpu_custom_call.1} parent=0
    _
  %s11 = ssub.s32 1, %s9
  %s12 = scalar_select 0, %s11, %s9
  $region1: #{tpu_custom_call.1} parent=0
    #allocation2 [shape = 'u8[8192]{0}', space=vmem, size = 0x2000, scoped, tag = 'output window, operand 0']
    #allocation3 [shape = 's32[2]{0}', space=sflag, size = 0x8, scoped, tag = 'scoped memory for tpu_custom_call.1']
    %13 = vsyncpa [#allocation3], 0
    %s14 = scalar_lea.sflag [#allocation3], 1
    %15 = vsyncpa %s14, 0
    loop: start=0, step=1, limit=4
    $region2: #{tpu_custom_call.1} parent=1 // loop_pre_header
      _
    $region3: #{tpu_custom_call.1} parent=1 // loop_header
      %s17 = sphi 0, %s21
      %p18 = scmp.ge.s32.totalorder %s17, 4
      %s24 = sphi 0, %s36
      %s25 = sphi 0, %s32
      %s26 = sphi 0, %s24
      %s27 = sphi 0, %s25
      %s28 = sphi 0, %s26
      %s29 = sphi 0, %s27
      %s39 = sphi 0, %s41
      %s42 = sphi 0, %s39
      %s43 = sphi 0, %s42
      %s59 = sphi 0, %s43
      %s65 = sphi 0, %s67
      %s68 = sphi 0, %s65
      %s69 = sphi 0, %s68
      %s85 = sphi 0, %s69
      %s93 = sphi 0, %s95
      %s96 = sphi 0, %s93
      %s97 = sphi 0, %s96
      %s113 = sphi 0, %s97
      %s121 = sphi 0, %s123
      %s124 = sphi 0, %s121
      %s125 = sphi 0, %s124
      %s141 = sphi 0, %s125
      %s145 = sphi 0, %s145
      %s147 = sphi 0, %s145
      %s148 = sphi 0, %s147
      %s162 = sphi 0, %s148
      %s166 = sphi 0, %s166
      %s168 = sphi 0, %s166
      %s169 = sphi 0, %s168
      %s183 = sphi 0, %s169
      %s187 = sphi 0, %s187
      %s189 = sphi 0, %s187
      %s190 = sphi 0, %s189
      %s204 = sphi 0, %s190
      %s208 = sphi 0, %s208
      %s210 = sphi 0, %s208
      %s211 = sphi 0, %s210
      %s225 = sphi 0, %s211
      %s233 = sphi 0, %s235
      %s236 = sphi 0, %s233
      %s237 = sphi 0, %s236
      %s253 = sphi 0, %s237
    $region4: #{tpu_custom_call.1} parent=1 // loop_header_branch
      %20 = sbr.rel (%p18) target = $region8
    $region5: #{tpu_custom_call.1} parent=1 // loop_body
      %s22 = ssub.s32 %s17, 1
      %s23 = ssub.s32 %s17, 2
      %s30 = sadd.s32 1, %s25
      %p31 = scmp.ge.s32.totalorder %s30, 1
      %s32 = scalar_select %p31, 0, %s30
      %s33 = sadd.s32 1, %s24
      %s34 = scalar_select %p31, %s33, %s24
      %p35 = scmp.ge.s32.totalorder %s34, 2
      %s36 = scalar_select %p35, 0, %s34
      %s37 = ssub.s32 %s24, %s36
      %p38 = scmp.eq.s32.totalorder %s37, 0
      %s40 = sadd.s32 %s39, 1
      %s41 = scalar_select %p38, %s39, %s40
      %p44 = pneg %p38
      %p45 = scmp.eq.s32.totalorder %s17, 1
      %p46 = por %p44, %p45
      %p47 = scmp.ne.s32.totalorder %s39, %s42
      %p48 = scmp.eq.s32.totalorder %s17, 0
      %p49 = por %p47, %p48
      %p50 = scmp.ne.s32.totalorder %s39, %s42
      %p51 = scmp.eq.s32.totalorder %s22, 1
      %p52 = por %p50, %p51
      %p53 = scmp.ne.s32.totalorder %s42, %s43
      %p54 = scmp.eq.s32.totalorder %s22, 0
      %p55 = por %p53, %p54
      %p56 = scmp.ne.s32.totalorder %s42, %s43
      %p57 = scmp.eq.s32.totalorder %s23, 1
      %p58 = por %p56, %p57
      %p60 = scmp.ne.s32.totalorder %s43, %s59
      %p61 = scmp.eq.s32.totalorder %s23, 0
      %p62 = por %p60, %p61
      %s63 = ssub.s32 %s24, %s36
      %p64 = scmp.eq.s32.totalorder %s63, 0
      %s66 = sadd.s32 %s65, 1
      %s67 = scalar_select %p64, %s65, %s66
      %p70 = pneg %p64
      %p71 = scmp.eq.s32.totalorder %s17, 1
      %p72 = por %p70, %p71
      %p73 = scmp.ne.s32.totalorder %s65, %s68
      %p74 = scmp.eq.s32.totalorder %s17, 0
      %p75 = por %p73, %p74
      %p76 = scmp.ne.s32.totalorder %s65, %s68
      %p77 = scmp.eq.s32.totalorder %s22, 1
      %p78 = por %p76, %p77
      %p79 = scmp.ne.s32.totalorder %s68, %s69
      %p80 = scmp.eq.s32.totalorder %s22, 0
      %p81 = por %p79, %p80
      %p82 = scmp.ne.s32.totalorder %s68, %s69
      %p83 = scmp.eq.s32.totalorder %s23, 1
      %p84 = por %p82, %p83
      %p86 = scmp.ne.s32.totalorder %s69, %s85
      %p87 = scmp.eq.s32.totalorder %s23, 0
      %p88 = por %p86, %p87
      %s89 = ssub.s32 %s24, %s36
      %s90 = ssub.s32 %s25, %s32
      %s91 = sor.u32 %s89, %s90
      %p92 = scmp.eq.s32.totalorder %s91, 0
      %s94 = sadd.s32 %s93, 1
      %s95 = scalar_select %p92, %s93, %s94
      %p98 = pneg %p92
      %p99 = scmp.eq.s32.totalorder %s17, 1
      %p100 = por %p98, %p99
      %p101 = scmp.ne.s32.totalorder %s93, %s96
      %p102 = scmp.eq.s32.totalorder %s17, 0
      %p103 = por %p101, %p102
      %p104 = scmp.ne.s32.totalorder %s93, %s96
      %p105 = scmp.eq.s32.totalorder %s22, 1
      %p106 = por %p104, %p105
      %p107 = scmp.ne.s32.totalorder %s96, %s97
      %p108 = scmp.eq.s32.totalorder %s22, 0
      %p109 = por %p107, %p108
      %p110 = scmp.ne.s32.totalorder %s96, %s97
      %p111 = scmp.eq.s32.totalorder %s23, 1
      %p112 = por %p110, %p111
      %p114 = scmp.ne.s32.totalorder %s97, %s113
      %p115 = scmp.eq.s32.totalorder %s23, 0
      %p116 = por %p114, %p115
      %s117 = ssub.s32 %s24, %s36
      %s118 = ssub.s32 %s25, %s32
      %s119 = sor.u32 %s117, %s118
      %p120 = scmp.eq.s32.totalorder %s119, 0
      %s122 = sadd.s32 %s121, 1
      %s123 = scalar_select %p120, %s121, %s122
      %p126 = pneg %p120
      %p127 = scmp.eq.s32.totalorder %s17, 1
      %p128 = por %p126, %p127
      %p129 = scmp.ne.s32.totalorder %s121, %s124
      %p130 = scmp.eq.s32.totalorder %s17, 0
      %p131 = por %p129, %p130
      %p132 = scmp.ne.s32.totalorder %s121, %s124
      %p133 = scmp.eq.s32.totalorder %s22, 1
      %p134 = por %p132, %p133
      %p135 = scmp.ne.s32.totalorder %s124, %s125
      %p136 = scmp.eq.s32.totalorder %s22, 0
      %p137 = por %p135, %p136
      %p138 = scmp.ne.s32.totalorder %s124, %s125
      %p139 = scmp.eq.s32.totalorder %s23, 1
      %p140 = por %p138, %p139
      %p142 = scmp.ne.s32.totalorder %s125, %s141
      %p143 = scmp.eq.s32.totalorder %s23, 0
      %p144 = por %p142, %p143
      %s146 = sadd.s32 %s145, 1
      %p149 = scmp.eq.s32.totalorder %s17, 1
      %p150 = scmp.ne.s32.totalorder %s145, %s147
      %p151 = scmp.eq.s32.totalorder %s17, 0
      %p152 = por %p150, %p151
      %p153 = scmp.ne.s32.totalorder %s145, %s147
      %p154 = scmp.eq.s32.totalorder %s22, 1
      %p155 = por %p153, %p154
      %p156 = scmp.ne.s32.totalorder %s147, %s148
      %p157 = scmp.eq.s32.totalorder %s22, 0
      %p158 = por %p156, %p157
      %p159 = scmp.ne.s32.totalorder %s147, %s148
      %p160 = scmp.eq.s32.totalorder %s23, 1
      %p161 = por %p159, %p160
      %p163 = scmp.ne.s32.totalorder %s148, %s162
      %p164 = scmp.eq.s32.totalorder %s23, 0
      %p165 = por %p163, %p164
      %s167 = sadd.s32 %s166, 1
      %p170 = scmp.eq.s32.totalorder %s17, 1
      %p171 = scmp.ne.s32.totalorder %s166, %s168
      %p172 = scmp.eq.s32.totalorder %s17, 0
      %p173 = por %p171, %p172
      %p174 = scmp.ne.s32.totalorder %s166, %s168
      %p175 = scmp.eq.s32.totalorder %s22, 1
      %p176 = por %p174, %p175
      %p177 = scmp.ne.s32.totalorder %s168, %s169
      %p178 = scmp.eq.s32.totalorder %s22, 0
      %p179 = por %p177, %p178
      %p180 = scmp.ne.s32.totalorder %s168, %s169
      %p181 = scmp.eq.s32.totalorder %s23, 1
      %p182 = por %p180, %p181
      %p184 = scmp.ne.s32.totalorder %s169, %s183
      %p185 = scmp.eq.s32.totalorder %s23, 0
      %p186 = por %p184, %p185
      %s188 = sadd.s32 %s187, 1
      %p191 = scmp.eq.s32.totalorder %s17, 1
      %p192 = scmp.ne.s32.totalorder %s187, %s189
      %p193 = scmp.eq.s32.totalorder %s17, 0
      %p194 = por %p192, %p193
      %p195 = scmp.ne.s32.totalorder %s187, %s189
      %p196 = scmp.eq.s32.totalorder %s22, 1
      %p197 = por %p195, %p196
      %p198 = scmp.ne.s32.totalorder %s189, %s190
      %p199 = scmp.eq.s32.totalorder %s22, 0
      %p200 = por %p198, %p199
      %p201 = scmp.ne.s32.totalorder %s189, %s190
      %p202 = scmp.eq.s32.totalorder %s23, 1
      %p203 = por %p201, %p202
      %p205 = scmp.ne.s32.totalorder %s190, %s204
      %p206 = scmp.eq.s32.totalorder %s23, 0
      %p207 = por %p205, %p206
      %s209 = sadd.s32 %s208, 1
      %p212 = scmp.eq.s32.totalorder %s17, 1
      %p213 = scmp.ne.s32.totalorder %s208, %s210
      %p214 = scmp.eq.s32.totalorder %s17, 0
      %p215 = por %p213, %p214
      %p216 = scmp.ne.s32.totalorder %s208, %s210
      %p217 = scmp.eq.s32.totalorder %s22, 1
      %p218 = por %p216, %p217
      %p219 = scmp.ne.s32.totalorder %s210, %s211
      %p220 = scmp.eq.s32.totalorder %s22, 0
      %p221 = por %p219, %p220
      %p222 = scmp.ne.s32.totalorder %s210, %s211
      %p223 = scmp.eq.s32.totalorder %s23, 1
      %p224 = por %p222, %p223
      %p226 = scmp.ne.s32.totalorder %s211, %s225
      %p227 = scmp.eq.s32.totalorder %s23, 0
      %p228 = por %p226, %p227
      %s229 = ssub.s32 %s24, %s36
      %s230 = ssub.s32 %s25, %s32
      %s231 = sor.u32 %s229, %s230
      %p232 = scmp.eq.s32.totalorder %s231, 0
      %s234 = sadd.s32 %s233, 1
      %s235 = scalar_select %p232, %s233, %s234
      %p238 = pneg %p232
      %p239 = scmp.eq.s32.totalorder %s17, 1
      %p240 = por %p238, %p239
      %p241 = scmp.ne.s32.totalorder %s233, %s236
      %p242 = scmp.eq.s32.totalorder %s17, 0
      %p243 = por %p241, %p242
      %p244 = scmp.ne.s32.totalorder %s233, %s236
      %p245 = scmp.eq.s32.totalorder %s22, 1
      %p246 = por %p244, %p245
      %p247 = scmp.ne.s32.totalorder %s236, %s237
      %p248 = scmp.eq.s32.totalorder %s22, 0
      %p249 = por %p247, %p248
      %p250 = scmp.ne.s32.totalorder %s236, %s237
      %p251 = scmp.eq.s32.totalorder %s23, 1
      %p252 = por %p250, %p251
      %p254 = scmp.ne.s32.totalorder %s237, %s253
      %p255 = scmp.eq.s32.totalorder %s23, 0
      %p256 = por %p254, %p255
      %p257 = scmp.le.s32.totalorder 1, %s17
      %p258 = scmp.lt.s32.totalorder %s17, 3
      %p259 = pnand %p257, %p258
      %p260 = pneg %p259
      // Predicated region
      $region9: #{tpu_custom_call.1} parent=5 // pred_check
        _
      $region10: #{tpu_custom_call.1} parent=5 // pred_check_branch
        %262 = sbr.rel (%p259) target = $region12
      $region11: #{tpu_custom_call.1} parent=5 // pred_region
        %s263 = ssub.s32 %s17, 1
        // Predicated region
        $region13: #{tpu_custom_call.1} parent=11 // pred_check
          %p264 = pneg %p158
        $region14: #{tpu_custom_call.1} parent=11 // pred_check_branch
          %266 = sbr.rel (%p264) target = $region16
        $region15: #{tpu_custom_call.1} parent=11 // pred_region
          _
        $region16: #{tpu_custom_call.1} parent=11 // pred_fallthru
          _
        // Predicated region
        $region17: #{tpu_custom_call.1} parent=11 // pred_check
          %p267 = pneg %p179
        $region18: #{tpu_custom_call.1} parent=11 // pred_check_branch
          %269 = sbr.rel (%p267) target = $region20
        $region19: #{tpu_custom_call.1} parent=11 // pred_region
          _
        $region20: #{tpu_custom_call.1} parent=11 // pred_fallthru
          _
        // Predicated region
        $region21: #{tpu_custom_call.1} parent=11 // pred_check
          %p270 = pneg %p200
        $region22: #{tpu_custom_call.1} parent=11 // pred_check_branch
          %272 = sbr.rel (%p270) target = $region24
        $region23: #{tpu_custom_call.1} parent=11 // pred_region
          _
        $region24: #{tpu_custom_call.1} parent=11 // pred_fallthru
          _
        // Predicated region
        $region25: #{tpu_custom_call.1} parent=11 // pred_check
          %p273 = pneg %p221
        $region26: #{tpu_custom_call.1} parent=11 // pred_check_branch
          %275 = sbr.rel (%p273) target = $region28
        $region27: #{tpu_custom_call.1} parent=11 // pred_region
          _
        $region28: #{tpu_custom_call.1} parent=11 // pred_fallthru
          _
      $region12: #{tpu_custom_call.1} parent=5 // pred_fallthru
        _
      %p276 = scmp.lt.s32.totalorder %s17, 2
      // Predicated region
      $region29: #{tpu_custom_call.1} parent=5 // pred_check
        %p277 = pneg %p276
      $region30: #{tpu_custom_call.1} parent=5 // pred_check_branch
        %279 = sbr.rel (%p277) target = $region32
      $region31: #{tpu_custom_call.1} parent=5 // pred_region
        // Predicated region
        $region33: #{tpu_custom_call.1} parent=31 // pred_check
          %p280 = pneg %p49
        $region34: #{tpu_custom_call.1} parent=31 // pred_check_branch
          %282 = sbr.rel (%p280) target = $region36
        $region35: #{tpu_custom_call.1} parent=31 // pred_region
          %p283 = scmp.lt.s32.totalorder %s24, 1
          %s284 = scalar_select %p283, %s24, 1
          %s285 = smul.addr %s284, 8
          %s286 = scalar_lea.vmem %s0, %s285
        $region36: #{tpu_custom_call.1} parent=31 // pred_fallthru
          _
        // Predicated region
        $region37: #{tpu_custom_call.1} parent=31 // pred_check
          %p287 = pneg %p75
        $region38: #{tpu_custom_call.1} parent=31 // pred_check_branch
          %289 = sbr.rel (%p287) target = $region40
        $region39: #{tpu_custom_call.1} parent=31 // pred_region
          %p290 = scmp.lt.s32.totalorder %s24, 1
          %s291 = scalar_select %p290, %s24, 1
          %s292 = smul.addr %s291, 8
          %s293 = scalar_lea.vmem %s1, %s292
        $region40: #{tpu_custom_call.1} parent=31 // pred_fallthru
          _
        // Predicated region
        $region41: #{tpu_custom_call.1} parent=31 // pred_check
          %p294 = pneg %p103
        $region42: #{tpu_custom_call.1} parent=31 // pred_check_branch
          %296 = sbr.rel (%p294) target = $region44
        $region43: #{tpu_custom_call.1} parent=31 // pred_region
          %p297 = scmp.lt.s32.totalorder %s24, 1
          %s298 = scalar_select %p297, %s24, 1
          %p299 = scmp.lt.s32.totalorder %s25, 0
          %s300 = scalar_select %p299, %s25, 0
          %s301 = sadd.s32 %s300, %s298
          %s302 = smul.addr %s301, 8
          %s303 = scalar_lea.vmem %s2, %s302
        $region44: #{tpu_custom_call.1} parent=31 // pred_fallthru
          _
        // Predicated region
        $region45: #{tpu_custom_call.1} parent=31 // pred_check
          %p304 = pneg %p131
        $region46: #{tpu_custom_call.1} parent=31 // pred_check_branch
          %306 = sbr.rel (%p304) target = $region48
        $region47: #{tpu_custom_call.1} parent=31 // pred_region
          %p307 = scmp.lt.s32.totalorder %s24, 1
          %s308 = scalar_select %p307, %s24, 1
          %p309 = scmp.lt.s32.totalorder %s25, 0
          %s310 = scalar_select %p309, %s25, 0
          %s311 = sadd.s32 %s310, %s308
          %s312 = smul.addr %s311, 2
          %s313 = scalar_lea.vmem %s3, %s312
        $region48: #{tpu_custom_call.1} parent=31 // pred_fallthru
          _
      $region32: #{tpu_custom_call.1} parent=5 // pred_fallthru
        _
      %p314 = scmp.le.s32.totalorder 1, %s17
      %p315 = scmp.lt.s32.totalorder %s17, 3
      %p316 = pnand %p314, %p315
      %p317 = pneg %p316
      // Predicated region
      $region49: #{tpu_custom_call.1} parent=5 // pred_check
        _
      $region50: #{tpu_custom_call.1} parent=5 // pred_check_branch
        %319 = sbr.rel (%p316) target = $region52
      $region51: #{tpu_custom_call.1} parent=5 // pred_region
        %s320 = ssub.s32 %s17, 1
        %p321 = scmp.lt.s32.totalorder %s26, 1
        %s322 = scalar_select %p321, %s26, 1
        %s323 = smul.addr %s322, 8
        %s324 = scalar_lea.vmem %s0, %s323
        %p325 = pneg %p55
        %p326 = pneg %p52
        %p327 = scmp.lt.s32.totalorder %s26, 1
        %s328 = scalar_select %p327, %s26, 1
        %s329 = smul.addr %s328, 8
        %s330 = scalar_lea.vmem %s1, %s329
        %p331 = pneg %p81
        %p332 = pneg %p78
        %p333 = scmp.lt.s32.totalorder %s26, 1
        %s334 = scalar_select %p333, %s26, 1
        %p335 = scmp.lt.s32.totalorder %s27, 0
        %s336 = scalar_select %p335, %s27, 0
        %s337 = sadd.s32 %s336, %s334
        %s338 = smul.addr %s337, 8
        %s339 = scalar_lea.vmem %s2, %s338
        %p340 = pneg %p109
        %p341 = pneg %p106
        %p342 = scmp.lt.s32.totalorder %s26, 1
        %s343 = scalar_select %p342, %s26, 1
        %p344 = scmp.lt.s32.totalorder %s27, 0
        %s345 = scalar_select %p344, %s27, 0
        %s346 = sadd.s32 %s345, %s343
        %s347 = smul.addr %s346, 2
        %s348 = scalar_lea.vmem %s3, %s347
        %p349 = pneg %p137
        %p350 = pneg %p134
        %p351 = pneg %p158
        %p352 = pneg %p155
        %p353 = pneg %p179
        %p354 = pneg %p176
        %p355 = pneg %p200
        %p356 = pneg %p197
        %p357 = pneg %p221
        %p358 = pneg %p218
        %p359 = pneg %p249
        %p360 = pneg %p246
        %s361 = sand.u32 %s236, 1
        %s362 = scalar_lea.sflag [#allocation3], %s361
        %s363 = sand.u32 %s236, 1
        %s364 = smul.addr %s363, 8
        %s365 = scalar_lea.vmem [#allocation2], %s364
        %p366 = scmp.lt.s32.totalorder %s26, 1
        %s367 = scalar_select %p366, %s26, 1
        %s368 = smul.addr %s367, 8
        %s369 = scalar_lea.vmem %s0, %s368
        %p370 = scmp.lt.s32.totalorder %s26, 1
        %s371 = scalar_select %p370, %s26, 1
        %s372 = smul.addr %s371, 8
        %s373 = scalar_lea.vmem %s1, %s372
        %p374 = scmp.lt.s32.totalorder %s26, 1
        %s375 = scalar_select %p374, %s26, 1
        %p376 = scmp.lt.s32.totalorder %s27, 0
        %s377 = scalar_select %p376, %s27, 0
        %s378 = sadd.s32 %s377, %s375
        %s379 = smul.addr %s378, 8
        %s380 = scalar_lea.vmem %s2, %s379
        %p381 = scmp.lt.s32.totalorder %s26, 1
        %s382 = scalar_select %p381, %s26, 1
        %p383 = scmp.lt.s32.totalorder %s27, 0
        %s384 = scalar_select %p383, %s27, 0
        %s385 = sadd.s32 %s384, %s382
        %s386 = smul.addr %s385, 2
        %s387 = scalar_lea.vmem %s3, %s386
        %v391 = vld [vmem:[%s369] sm:$0xff]
        %v392 = vpack.c.bf16 %v391, %v391
        %v393 = vld [vmem:[%s373] sm:$0xff]
        %v394 = vpack.c.bf16 %v393, %v393
        %v395 = vld [vmem:[%s380] sm:$0xff]
        %v396 = vpack.c.bf16 %v395, %v395
        %v397 = vld [vmem:[%s4] sm:$0xf]
        %v398 = vld [vmem:[%s4 + $0x4] sm:$0xf]
        %v399 = vld [vmem:[%s4 + $0x8] sm:$0xf]
        %v400 = vld [vmem:[%s4 + $0xc] sm:$0xf]
        %v401 = vld [vmem:[%s4 + $0x10] sm:$0xf]
        %v402 = vld [vmem:[%s4 + $0x14] sm:$0xf]
        %v403 = vld [vmem:[%s4 + $0x18] sm:$0xf]
        %v404 = vld [vmem:[%s4 + $0x1c] sm:$0xf]
        %v405 = vld [vmem:[%s4 + $0x20] sm:$0xf]
        %v406 = vld [vmem:[%s4 + $0x24] sm:$0xf]
        %v407 = vld [vmem:[%s4 + $0x28] sm:$0xf]
        %v408 = vld [vmem:[%s4 + $0x2c] sm:$0xf]
        %v409 = vld [vmem:[%s4 + $0x30] sm:$0xf]
        %v410 = vld [vmem:[%s4 + $0x34] sm:$0xf]
        %v411 = vld [vmem:[%s4 + $0x38] sm:$0xf]
        %v412 = vld [vmem:[%s4 + $0x3c] sm:$0xf]
        %v413 = vld [vmem:[%s5] sm:$0x1]
        %v414 = vld [vmem:[%s5 + $0x1] sm:$0x1]
        %v415 = vld [vmem:[%s5 + $0x2] sm:$0x1]
        %v416 = vld [vmem:[%s5 + $0x3] sm:$0x1]
        %v421 = vlaneseq
        %v422 = vshrl.u32 %v421, 7
        %v423 = vsub.s32 0, %v422
        %v424 = vrot.slane %v413, %v423
        %v425 = vlaneseq
        %v426 = vshrl.u32 %v425, 7
        %v427 = vsub.s32 0, %v426
        %v428 = vrot.slane %v414, %v427
        %v429 = vlaneseq
        %v430 = vshrl.u32 %v429, 7
        %v431 = vsub.s32 0, %v430
        %v432 = vrot.slane %v415, %v431
        %v433 = vlaneseq
        %v434 = vshrl.u32 %v433, 7
        %v435 = vsub.s32 0, %v434
        %v436 = vrot.slane %v416, %v435
        %v445 = vunpack.c.l.b16 %v397
        %v446 = vunpack.c.l.b16 %v398
        %v447 = vunpack.c.l.b16 %v399
        %v448 = vunpack.c.l.b16 %v400
        %v449 = vpack.c.b16 %v446, %v445
        %v450 = vpack.c.b16 %v448, %v447
        %vm453 = vcmask 261120
        %v455 = vsel %vm453, %v392, 0
        %457 = vmatprep.subr.bf16.mxu0 0
        %458 = vmatpush1.bf16.msra.mxu0 %v449
        %459 = vmatprep.subr.bf16.mxu0 0
        %460 = vmatpush1.bf16.msra.mxu0 %v450
        %461 = vmatprep.subr.bf16.mxu0 0
        %462 = vmatpush1.bf16.msra.mxu0 0
        %463 = vmatprep.subr.bf16.mxu0 0
        %464 = vmatpush1.bf16.msra.mxu0 0
        %465 = vmatprep.subr.bf16.mxu0 0
        %466 = vmatpush1.bf16.msra.mxu0 0
        %467 = vmatprep.subr.bf16.mxu0 0
        %468 = vmatpush1.bf16.msra.mxu0 0
        %469 = vmatprep.subr.bf16.mxu0 0
        %470 = vmatpush1.bf16.msra.mxu0 0
        %471 = vmatprep.subr.bf16.mxu0 0
        %472 = vmatpush1.bf16.msra.mxu0 0
        %473 = vmatprep.subr.bf16.mxu0 0
        %474 = vmatpush1.bf16.msra.mxu0 0
        %475 = vmatprep.subr.bf16.mxu0 0
        %476 = vmatpush1.bf16.msra.mxu0 0
        %477 = vmatprep.subr.bf16.mxu0 0
        %478 = vmatpush1.bf16.msra.mxu0 0
        %479 = vmatprep.subr.bf16.mxu0 0
        %480 = vmatpush1.bf16.msra.mxu0 0
        %481 = vmatprep.subr.bf16.mxu0 0
        %482 = vmatpush1.bf16.msra.mxu0 0
        %483 = vmatprep.subr.bf16.mxu0 0
        %484 = vmatpush1.bf16.msra.mxu0 0
        %485 = vmatprep.subr.bf16.mxu0 0
        %486 = vmatpush1.bf16.msra.mxu0 0
        %487 = vmatprep.subr.bf16.mxu0 0
        %488 = vmatpush1.bf16.msra.mxu0 0
        %489 = vmatprep.mubr.bf16.mxu0 0
        %490 = vmatmul.mubr.bf16.gmra.mrb[0].mxu0 %v455
        %v491 = vpop.f32.mrb[0].mxu0
        %v492 = vadd.f32 %v424, %v491
        %v493 = vpop.f32.mrb[0].mxu0
        %v494 = vpop.f32.mrb[0].mxu0
        %v495 = vpop.f32.mrb[0].mxu0
        %496 = vdwg.mxu0
        %v501 = vunpack.c.l.b16 %v401
        %v502 = vunpack.c.l.b16 %v402
        %v503 = vunpack.c.l.b16 %v403
        %v504 = vunpack.c.l.b16 %v404
        %v505 = vpack.c.b16 %v502, %v501
        %v506 = vpack.c.b16 %v504, %v503
        %509 = vmatprep.subr.bf16.mxu0 0
        %510 = vmatpush1.bf16.msra.mxu0 %v505
        %511 = vmatprep.subr.bf16.mxu0 0
        %512 = vmatpush1.bf16.msra.mxu0 %v506
        %513 = vmatprep.subr.bf16.mxu0 0
        %514 = vmatpush1.bf16.msra.mxu0 0
        %515 = vmatprep.subr.bf16.mxu0 0
        %516 = vmatpush1.bf16.msra.mxu0 0
        %517 = vmatprep.subr.bf16.mxu0 0
        %518 = vmatpush1.bf16.msra.mxu0 0
        %519 = vmatprep.subr.bf16.mxu0 0
        %520 = vmatpush1.bf16.msra.mxu0 0
        %521 = vmatprep.subr.bf16.mxu0 0
        %522 = vmatpush1.bf16.msra.mxu0 0
        %523 = vmatprep.subr.bf16.mxu0 0
        %524 = vmatpush1.bf16.msra.mxu0 0
        %525 = vmatprep.subr.bf16.mxu0 0
        %526 = vmatpush1.bf16.msra.mxu0 0
        %527 = vmatprep.subr.bf16.mxu0 0
        %528 = vmatpush1.bf16.msra.mxu0 0
        %529 = vmatprep.subr.bf16.mxu0 0
        %530 = vmatpush1.bf16.msra.mxu0 0
        %531 = vmatprep.subr.bf16.mxu0 0
        %532 = vmatpush1.bf16.msra.mxu0 0
        %533 = vmatprep.subr.bf16.mxu0 0
        %534 = vmatpush1.bf16.msra.mxu0 0
        %535 = vmatprep.subr.bf16.mxu0 0
        %536 = vmatpush1.bf16.msra.mxu0 0
        %537 = vmatprep.subr.bf16.mxu0 0
        %538 = vmatpush1.bf16.msra.mxu0 0
        %539 = vmatprep.subr.bf16.mxu0 0
        %540 = vmatpush1.bf16.msra.mxu0 0
        %541 = vmatprep.mubr.bf16.mxu0 0
        %542 = vmatmul.mubr.bf16.gmra.mrb[0].mxu0 %v455
        %v543 = vpop.f32.mrb[0].mxu0
        %v544 = vadd.f32 %v428, %v543
        %v545 = vpop.f32.mrb[0].mxu0
        %v546 = vpop.f32.mrb[0].mxu0
        %v547 = vpop.f32.mrb[0].mxu0
        %548 = vdwg.mxu0
        %v553 = vunpack.c.l.b16 %v405
        %v554 = vunpack.c.l.b16 %v406
        %v555 = vunpack.c.l.b16 %v407
        %v556 = vunpack.c.l.b16 %v408
        %v557 = vpack.c.b16 %v554, %v553
        %v558 = vpack.c.b16 %v556, %v555
        %561 = vmatprep.subr.bf16.mxu0 0
        %562 = vmatpush1.bf16.msra.mxu0 %v557
        %563 = vmatprep.subr.bf16.mxu0 0
        %564 = vmatpush1.bf16.msra.mxu0 %v558
        %565 = vmatprep.subr.bf16.mxu0 0
        %566 = vmatpush1.bf16.msra.mxu0 0
        %567 = vmatprep.subr.bf16.mxu0 0
        %568 = vmatpush1.bf16.msra.mxu0 0
        %569 = vmatprep.subr.bf16.mxu0 0
        %570 = vmatpush1.bf16.msra.mxu0 0
        %571 = vmatprep.subr.bf16.mxu0 0
        %572 = vmatpush1.bf16.msra.mxu0 0
        %573 = vmatprep.subr.bf16.mxu0 0
        %574 = vmatpush1.bf16.msra.mxu0 0
        %575 = vmatprep.subr.bf16.mxu0 0
        %576 = vmatpush1.bf16.msra.mxu0 0
        %577 = vmatprep.subr.bf16.mxu0 0
        %578 = vmatpush1.bf16.msra.mxu0 0
        %579 = vmatprep.subr.bf16.mxu0 0
        %580 = vmatpush1.bf16.msra.mxu0 0
        %581 = vmatprep.subr.bf16.mxu0 0
        %582 = vmatpush1.bf16.msra.mxu0 0
        %583 = vmatprep.subr.bf16.mxu0 0
        %584 = vmatpush1.bf16.msra.mxu0 0
        %585 = vmatprep.subr.bf16.mxu0 0
        %586 = vmatpush1.bf16.msra.mxu0 0
        %587 = vmatprep.subr.bf16.mxu0 0
        %588 = vmatpush1.bf16.msra.mxu0 0
        %589 = vmatprep.subr.bf16.mxu0 0
        %590 = vmatpush1.bf16.msra.mxu0 0
        %591 = vmatprep.subr.bf16.mxu0 0
        %592 = vmatpush1.bf16.msra.mxu0 0
        %593 = vmatprep.mubr.bf16.mxu0 0
        %594 = vmatmul.mubr.bf16.gmra.mrb[0].mxu0 %v455
        %v595 = vpop.f32.mrb[0].mxu0
        %v596 = vadd.f32 %v432, %v595
        %v597 = vpop.f32.mrb[0].mxu0
        %v598 = vpop.f32.mrb[0].mxu0
        %v599 = vpop.f32.mrb[0].mxu0
        %600 = vdwg.mxu0
        %v605 = vunpack.c.l.b16 %v409
        %v606 = vunpack.c.l.b16 %v410
        %v607 = vunpack.c.l.b16 %v411
        %v608 = vunpack.c.l.b16 %v412
        %v609 = vpack.c.b16 %v606, %v605
        %v610 = vpack.c.b16 %v608, %v607
        %613 = vmatprep.subr.bf16.mxu0 0
        %614 = vmatpush1.bf16.msra.mxu0 %v609
        %615 = vmatprep.subr.bf16.mxu0 0
        %616 = vmatpush1.bf16.msra.mxu0 %v610
        %617 = vmatprep.subr.bf16.mxu0 0
        %618 = vmatpush1.bf16.msra.mxu0 0
        %619 = vmatprep.subr.bf16.mxu0 0
        %620 = vmatpush1.bf16.msra.mxu0 0
        %621 = vmatprep.subr.bf16.mxu0 0
        %622 = vmatpush1.bf16.msra.mxu0 0
        %623 = vmatprep.subr.bf16.mxu0 0
        %624 = vmatpush1.bf16.msra.mxu0 0
        %625 = vmatprep.subr.bf16.mxu0 0
        %626 = vmatpush1.bf16.msra.mxu0 0
        %627 = vmatprep.subr.bf16.mxu0 0
        %628 = vmatpush1.bf16.msra.mxu0 0
        %629 = vmatprep.subr.bf16.mxu0 0
        %630 = vmatpush1.bf16.msra.mxu0 0
        %631 = vmatprep.subr.bf16.mxu0 0
        %632 = vmatpush1.bf16.msra.mxu0 0
        %633 = vmatprep.subr.bf16.mxu0 0
        %634 = vmatpush1.bf16.msra.mxu0 0
        %635 = vmatprep.subr.bf16.mxu0 0
        %636 = vmatpush1.bf16.msra.mxu0 0
        %637 = vmatprep.subr.bf16.mxu0 0
        %638 = vmatpush1.bf16.msra.mxu0 0
        %639 = vmatprep.subr.bf16.mxu0 0
        %640 = vmatpush1.bf16.msra.mxu0 0
        %641 = vmatprep.subr.bf16.mxu0 0
        %642 = vmatpush1.bf16.msra.mxu0 0
        %643 = vmatprep.subr.bf16.mxu0 0
        %644 = vmatpush1.bf16.msra.mxu0 0
        %645 = vmatprep.mubr.bf16.mxu0 0
        %646 = vmatmul.mubr.bf16.gmra.mrb[0].mxu0 %v455
        %v647 = vpop.f32.mrb[0].mxu0
        %v648 = vadd.f32 %v436, %v647
        %v649 = vpop.f32.mrb[0].mxu0
        %v650 = vpop.f32.mrb[0].mxu0
        %v651 = vpop.f32.mrb[0].mxu0
        %652 = vdwg.mxu0
        %s653 = scalar_lea.vmem %s4, 64
        %v654 = vld [vmem:[%s653] sm:$0xf]
        %v655 = vld [vmem:[%s653 + $0x4] sm:$0xf]
        %v656 = vld [vmem:[%s653 + $0x8] sm:$0xf]
        %v657 = vld [vmem:[%s653 + $0xc] sm:$0xf]
        %v658 = vld [vmem:[%s653 + $0x10] sm:$0xf]
        %v659 = vld [vmem:[%s653 + $0x14] sm:$0xf]
        %v660 = vld [vmem:[%s653 + $0x18] sm:$0xf]
        %v661 = vld [vmem:[%s653 + $0x1c] sm:$0xf]
        %v662 = vld [vmem:[%s653 + $0x20] sm:$0xf]
        %v663 = vld [vmem:[%s653 + $0x24] sm:$0xf]
        %v664 = vld [vmem:[%s653 + $0x28] sm:$0xf]
        %v665 = vld [vmem:[%s653 + $0x2c] sm:$0xf]
        %v666 = vld [vmem:[%s653 + $0x30] sm:$0xf]
        %v667 = vld [vmem:[%s653 + $0x34] sm:$0xf]
        %v668 = vld [vmem:[%s653 + $0x38] sm:$0xf]
        %v669 = vld [vmem:[%s653 + $0x3c] sm:$0xf]
        %s670 = scalar_lea.vmem %s5, 4
        %v671 = vld [vmem:[%s670] sm:$0x1]
        %v672 = vld [vmem:[%s670 + $0x1] sm:$0x1]
        %v673 = vld [vmem:[%s670 + $0x2] sm:$0x1]
        %v674 = vld [vmem:[%s670 + $0x3] sm:$0x1]
        %v679 = vlaneseq
        %v680 = vshrl.u32 %v679, 7
        %v681 = vsub.s32 0, %v680
        %v682 = vrot.slane %v671, %v681
        %v683 = vlaneseq
        %v684 = vshrl.u32 %v683, 7
        %v685 = vsub.s32 0, %v684
        %v686 = vrot.slane %v672, %v685
        %v687 = vlaneseq
        %v688 = vshrl.u32 %v687, 7
        %v689 = vsub.s32 0, %v688
        %v690 = vrot.slane %v673, %v689
        %v691 = vlaneseq
        %v692 = vshrl.u32 %v691, 7
        %v693 = vsub.s32 0, %v692
        %v694 = vrot.slane %v674, %v693
        %v703 = vunpack.c.l.b16 %v654
        %v704 = vunpack.c.l.b16 %v655
        %v705 = vunpack.c.l.b16 %v656
        %v706 = vunpack.c.l.b16 %v657
        %v707 = vpack.c.b16 %v704, %v703
        %v708 = vpack.c.b16 %v706, %v705
        %v712 = vsel %vm453, %v394, 0
        %714 = vmatprep.subr.bf16.mxu0 0
        %715 = vmatpush1.bf16.msra.mxu0 %v707
        %716 = vmatprep.subr.bf16.mxu0 0
        %717 = vmatpush1.bf16.msra.mxu0 %v708
        %718 = vmatprep.subr.bf16.mxu0 0
        %719 = vmatpush1.bf16.msra.mxu0 0
        %720 = vmatprep.subr.bf16.mxu0 0
        %721 = vmatpush1.bf16.msra.mxu0 0
        %722 = vmatprep.subr.bf16.mxu0 0
        %723 = vmatpush1.bf16.msra.mxu0 0
        %724 = vmatprep.subr.bf16.mxu0 0
        %725 = vmatpush1.bf16.msra.mxu0 0
        %726 = vmatprep.subr.bf16.mxu0 0
        %727 = vmatpush1.bf16.msra.mxu0 0
        %728 = vmatprep.subr.bf16.mxu0 0
        %729 = vmatpush1.bf16.msra.mxu0 0
        %730 = vmatprep.subr.bf16.mxu0 0
        %731 = vmatpush1.bf16.msra.mxu0 0
        %732 = vmatprep.subr.bf16.mxu0 0
        %733 = vmatpush1.bf16.msra.mxu0 0
        %734 = vmatprep.subr.bf16.mxu0 0
        %735 = vmatpush1.bf16.msra.mxu0 0
        %736 = vmatprep.subr.bf16.mxu0 0
        %737 = vmatpush1.bf16.msra.mxu0 0
        %738 = vmatprep.subr.bf16.mxu0 0
        %739 = vmatpush1.bf16.msra.mxu0 0
        %740 = vmatprep.subr.bf16.mxu0 0
        %741 = vmatpush1.bf16.msra.mxu0 0
        %742 = vmatprep.subr.bf16.mxu0 0
        %743 = vmatpush1.bf16.msra.mxu0 0
        %744 = vmatprep.subr.bf16.mxu0 0
        %745 = vmatpush1.bf16.msra.mxu0 0
        %746 = vmatprep.mubr.bf16.mxu0 0
        %747 = vmatmul.mubr.bf16.gmra.mrb[0].mxu0 %v712
        %v748 = vpop.f32.mrb[0].mxu0
        %v749 = vadd.f32 %v682, %v748
        %v750 = vpop.f32.mrb[0].mxu0
        %v751 = vpop.f32.mrb[0].mxu0
        %v752 = vpop.f32.mrb[0].mxu0
        %753 = vdwg.mxu0
        %v758 = vunpack.c.l.b16 %v658
        %v759 = vunpack.c.l.b16 %v659
        %v760 = vunpack.c.l.b16 %v660
        %v761 = vunpack.c.l.b16 %v661
        %v762 = vpack.c.b16 %v759, %v758
        %v763 = vpack.c.b16 %v761, %v760
        %766 = vmatprep.subr.bf16.mxu0 0
        %767 = vmatpush1.bf16.msra.mxu0 %v762
        %768 = vmatprep.subr.bf16.mxu0 0
        %769 = vmatpush1.bf16.msra.mxu0 %v763
        %770 = vmatprep.subr.bf16.mxu0 0
        %771 = vmatpush1.bf16.msra.mxu0 0
        %772 = vmatprep.subr.bf16.mxu0 0
        %773 = vmatpush1.bf16.msra.mxu0 0
        %774 = vmatprep.subr.bf16.mxu0 0
        %775 = vmatpush1.bf16.msra.mxu0 0
        %776 = vmatprep.subr.bf16.mxu0 0
        %777 = vmatpush1.bf16.msra.mxu0 0
        %778 = vmatprep.subr.bf16.mxu0 0
        %779 = vmatpush1.bf16.msra.mxu0 0
        %780 = vmatprep.subr.bf16.mxu0 0
        %781 = vmatpush1.bf16.msra.mxu0 0
        %782 = vmatprep.subr.bf16.mxu0 0
        %783 = vmatpush1.bf16.msra.mxu0 0
        %784 = vmatprep.subr.bf16.mxu0 0
        %785 = vmatpush1.bf16.msra.mxu0 0
        %786 = vmatprep.subr.bf16.mxu0 0
        %787 = vmatpush1.bf16.msra.mxu0 0
        %788 = vmatprep.subr.bf16.mxu0 0
        %789 = vmatpush1.bf16.msra.mxu0 0
        %790 = vmatprep.subr.bf16.mxu0 0
        %791 = vmatpush1.bf16.msra.mxu0 0
        %792 = vmatprep.subr.bf16.mxu0 0
        %793 = vmatpush1.bf16.msra.mxu0 0
        %794 = vmatprep.subr.bf16.mxu0 0
        %795 = vmatpush1.bf16.msra.mxu0 0
        %796 = vmatprep.subr.bf16.mxu0 0
        %797 = vmatpush1.bf16.msra.mxu0 0
        %798 = vmatprep.mubr.bf16.mxu0 0
        %799 = vmatmul.mubr.bf16.gmra.mrb[0].mxu0 %v712
        %v800 = vpop.f32.mrb[0].mxu0
        %v801 = vadd.f32 %v686, %v800
        %v802 = vpop.f32.mrb[0].mxu0
        %v803 = vpop.f32.mrb[0].mxu0
        %v804 = vpop.f32.mrb[0].mxu0
        %805 = vdwg.mxu0
        %v810 = vunpack.c.l.b16 %v662
        %v811 = vunpack.c.l.b16 %v663
        %v812 = vunpack.c.l.b16 %v664
        %v813 = vunpack.c.l.b16 %v665
        %v814 = vpack.c.b16 %v811, %v810
        %v815 = vpack.c.b16 %v813, %v812
        %818 = vmatprep.subr.bf16.mxu0 0
        %819 = vmatpush1.bf16.msra.mxu0 %v814
        %820 = vmatprep.subr.bf16.mxu0 0
        %821 = vmatpush1.bf16.msra.mxu0 %v815
        %822 = vmatprep.subr.bf16.mxu0 0
        %823 = vmatpush1.bf16.msra.mxu0 0
        %824 = vmatprep.subr.bf16.mxu0 0
        %825 = vmatpush1.bf16.msra.mxu0 0
        %826 = vmatprep.subr.bf16.mxu0 0
        %827 = vmatpush1.bf16.msra.mxu0 0
        %828 = vmatprep.subr.bf16.mxu0 0
        %829 = vmatpush1.bf16.msra.mxu0 0
        %830 = vmatprep.subr.bf16.mxu0 0
        %831 = vmatpush1.bf16.msra.mxu0 0
        %832 = vmatprep.subr.bf16.mxu0 0
        %833 = vmatpush1.bf16.msra.mxu0 0
        %834 = vmatprep.subr.bf16.mxu0 0
        %835 = vmatpush1.bf16.msra.mxu0 0
        %836 = vmatprep.subr.bf16.mxu0 0
        %837 = vmatpush1.bf16.msra.mxu0 0
        %838 = vmatprep.subr.bf16.mxu0 0
        %839 = vmatpush1.bf16.msra.mxu0 0
        %840 = vmatprep.subr.bf16.mxu0 0
        %841 = vmatpush1.bf16.msra.mxu0 0
        %842 = vmatprep.subr.bf16.mxu0 0
        %843 = vmatpush1.bf16.msra.mxu0 0
        %844 = vmatprep.subr.bf16.mxu0 0
        %845 = vmatpush1.bf16.msra.mxu0 0
        %846 = vmatprep.subr.bf16.mxu0 0
        %847 = vmatpush1.bf16.msra.mxu0 0
        %848 = vmatprep.subr.bf16.mxu0 0
        %849 = vmatpush1.bf16.msra.mxu0 0
        %850 = vmatprep.mubr.bf16.mxu0 0
        %851 = vmatmul.mubr.bf16.gmra.mrb[0].mxu0 %v712
        %v852 = vpop.f32.mrb[0].mxu0
        %v853 = vadd.f32 %v690, %v852
        %v854 = vpop.f32.mrb[0].mxu0
        %v855 = vpop.f32.mrb[0].mxu0
        %v856 = vpop.f32.mrb[0].mxu0
        %857 = vdwg.mxu0
        %v862 = vunpack.c.l.b16 %v666
        %v863 = vunpack.c.l.b16 %v667
        %v864 = vunpack.c.l.b16 %v668
        %v865 = vunpack.c.l.b16 %v669
        %v866 = vpack.c.b16 %v863, %v862
        %v867 = vpack.c.b16 %v865, %v864
        %870 = vmatprep.subr.bf16.mxu0 0
        %871 = vmatpush1.bf16.msra.mxu0 %v866
        %872 = vmatprep.subr.bf16.mxu0 0
        %873 = vmatpush1.bf16.msra.mxu0 %v867
        %874 = vmatprep.subr.bf16.mxu0 0
        %875 = vmatpush1.bf16.msra.mxu0 0
        %876 = vmatprep.subr.bf16.mxu0 0
        %877 = vmatpush1.bf16.msra.mxu0 0
        %878 = vmatprep.subr.bf16.mxu0 0
        %879 = vmatpush1.bf16.msra.mxu0 0
        %880 = vmatprep.subr.bf16.mxu0 0
        %881 = vmatpush1.bf16.msra.mxu0 0
        %882 = vmatprep.subr.bf16.mxu0 0
        %883 = vmatpush1.bf16.msra.mxu0 0
        %884 = vmatprep.subr.bf16.mxu0 0
        %885 = vmatpush1.bf16.msra.mxu0 0
        %886 = vmatprep.subr.bf16.mxu0 0
        %887 = vmatpush1.bf16.msra.mxu0 0
        %888 = vmatprep.subr.bf16.mxu0 0
        %889 = vmatpush1.bf16.msra.mxu0 0
        %890 = vmatprep.subr.bf16.mxu0 0
        %891 = vmatpush1.bf16.msra.mxu0 0
        %892 = vmatprep.subr.bf16.mxu0 0
        %893 = vmatpush1.bf16.msra.mxu0 0
        %894 = vmatprep.subr.bf16.mxu0 0
        %895 = vmatpush1.bf16.msra.mxu0 0
        %896 = vmatprep.subr.bf16.mxu0 0
        %897 = vmatpush1.bf16.msra.mxu0 0
        %898 = vmatprep.subr.bf16.mxu0 0
        %899 = vmatpush1.bf16.msra.mxu0 0
        %900 = vmatprep.subr.bf16.mxu0 0
        %901 = vmatpush1.bf16.msra.mxu0 0
        %902 = vmatprep.mubr.bf16.mxu0 0
        %903 = vmatmul.mubr.bf16.gmra.mrb[0].mxu0 %v712
        %v904 = vpop.f32.mrb[0].mxu0
        %v905 = vadd.f32 %v694, %v904
        %v906 = vpop.f32.mrb[0].mxu0
        %v907 = vpop.f32.mrb[0].mxu0
        %v908 = vpop.f32.mrb[0].mxu0
        %909 = vdwg.mxu0
        %s910 = scalar_lea.vmem %s4, 128
        %v911 = vld [vmem:[%s910] sm:$0xf]
        %v912 = vld [vmem:[%s910 + $0x4] sm:$0xf]
        %v913 = vld [vmem:[%s910 + $0x8] sm:$0xf]
        %v914 = vld [vmem:[%s910 + $0xc] sm:$0xf]
        %v915 = vld [vmem:[%s910 + $0x10] sm:$0xf]
        %v916 = vld [vmem:[%s910 + $0x14] sm:$0xf]
        %v917 = vld [vmem:[%s910 + $0x18] sm:$0xf]
        %v918 = vld [vmem:[%s910 + $0x1c] sm:$0xf]
        %v919 = vld [vmem:[%s910 + $0x20] sm:$0xf]
        %v920 = vld [vmem:[%s910 + $0x24] sm:$0xf]
        %v921 = vld [vmem:[%s910 + $0x28] sm:$0xf]
        %v922 = vld [vmem:[%s910 + $0x2c] sm:$0xf]
        %v923 = vld [vmem:[%s910 + $0x30] sm:$0xf]
        %v924 = vld [vmem:[%s910 + $0x34] sm:$0xf]
        %v925 = vld [vmem:[%s910 + $0x38] sm:$0xf]
        %v926 = vld [vmem:[%s910 + $0x3c] sm:$0xf]
        %s927 = scalar_lea.vmem %s5, 8
        %v928 = vld [vmem:[%s927] sm:$0x1]
        %v929 = vld [vmem:[%s927 + $0x1] sm:$0x1]
        %v930 = vld [vmem:[%s927 + $0x2] sm:$0x1]
        %v931 = vld [vmem:[%s927 + $0x3] sm:$0x1]
        %v936 = vlaneseq
        %v937 = vshrl.u32 %v936, 7
        %v938 = vsub.s32 0, %v937
        %v939 = vrot.slane %v928, %v938
        %v940 = vlaneseq
        %v941 = vshrl.u32 %v940, 7
        %v942 = vsub.s32 0, %v941
        %v943 = vrot.slane %v929, %v942
        %v944 = vlaneseq
        %v945 = vshrl.u32 %v944, 7
        %v946 = vsub.s32 0, %v945
        %v947 = vrot.slane %v930, %v946
        %v948 = vlaneseq
        %v949 = vshrl.u32 %v948, 7
        %v950 = vsub.s32 0, %v949
        %v951 = vrot.slane %v931, %v950
        %v960 = vunpack.c.l.b16 %v911
        %v961 = vunpack.c.l.b16 %v912
        %v962 = vunpack.c.l.b16 %v913
        %v963 = vunpack.c.l.b16 %v914
        %v964 = vpack.c.b16 %v961, %v960
        %v965 = vpack.c.b16 %v963, %v962
        %v969 = vsel %vm453, %v396, 0
        %971 = vmatprep.subr.bf16.mxu0 0
        %972 = vmatpush1.bf16.msra.mxu0 %v964
        %973 = vmatprep.subr.bf16.mxu0 0
        %974 = vmatpush1.bf16.msra.mxu0 %v965
        %975 = vmatprep.subr.bf16.mxu0 0
        %976 = vmatpush1.bf16.msra.mxu0 0
        %977 = vmatprep.subr.bf16.mxu0 0
        %978 = vmatpush1.bf16.msra.mxu0 0
        %979 = vmatprep.subr.bf16.mxu0 0
        %980 = vmatpush1.bf16.msra.mxu0 0
        %981 = vmatprep.subr.bf16.mxu0 0
        %982 = vmatpush1.bf16.msra.mxu0 0
        %983 = vmatprep.subr.bf16.mxu0 0
        %984 = vmatpush1.bf16.msra.mxu0 0
        %985 = vmatprep.subr.bf16.mxu0 0
        %986 = vmatpush1.bf16.msra.mxu0 0
        %987 = vmatprep.subr.bf16.mxu0 0
        %988 = vmatpush1.bf16.msra.mxu0 0
        %989 = vmatprep.subr.bf16.mxu0 0
        %990 = vmatpush1.bf16.msra.mxu0 0
        %991 = vmatprep.subr.bf16.mxu0 0
        %992 = vmatpush1.bf16.msra.mxu0 0
        %993 = vmatprep.subr.bf16.mxu0 0
        %994 = vmatpush1.bf16.msra.mxu0 0
        %995 = vmatprep.subr.bf16.mxu0 0
        %996 = vmatpush1.bf16.msra.mxu0 0
        %997 = vmatprep.subr.bf16.mxu0 0
        %998 = vmatpush1.bf16.msra.mxu0 0
        %999 = vmatprep.subr.bf16.mxu0 0
        %1000 = vmatpush1.bf16.msra.mxu0 0
        %1001 = vmatprep.subr.bf16.mxu0 0
        %1002 = vmatpush1.bf16.msra.mxu0 0
        %1003 = vmatprep.mubr.bf16.mxu0 0
        %1004 = vmatmul.mubr.bf16.gmra.mrb[0].mxu0 %v969
        %v1005 = vpop.f32.mrb[0].mxu0
        %v1006 = vadd.f32 %v939, %v1005
        %v1007 = vpop.f32.mrb[0].mxu0
        %v1008 = vpop.f32.mrb[0].mxu0
        %v1009 = vpop.f32.mrb[0].mxu0
        %1010 = vdwg.mxu0
        %v1015 = vunpack.c.l.b16 %v915
        %v1016 = vunpack.c.l.b16 %v916
        %v1017 = vunpack.c.l.b16 %v917
        %v1018 = vunpack.c.l.b16 %v918
        %v1019 = vpack.c.b16 %v1016, %v1015
        %v1020 = vpack.c.b16 %v1018, %v1017
        %1023 = vmatprep.subr.bf16.mxu0 0
        %1024 = vmatpush1.bf16.msra.mxu0 %v1019
        %1025 = vmatprep.subr.bf16.mxu0 0
        %1026 = vmatpush1.bf16.msra.mxu0 %v1020
        %1027 = vmatprep.subr.bf16.mxu0 0
        %1028 = vmatpush1.bf16.msra.mxu0 0
        %1029 = vmatprep.subr.bf16.mxu0 0
        %1030 = vmatpush1.bf16.msra.mxu0 0
        %1031 = vmatprep.subr.bf16.mxu0 0
        %1032 = vmatpush1.bf16.msra.mxu0 0
        %1033 = vmatprep.subr.bf16.mxu0 0
        %1034 = vmatpush1.bf16.msra.mxu0 0
        %1035 = vmatprep.subr.bf16.mxu0 0
        %1036 = vmatpush1.bf16.msra.mxu0 0
        %1037 = vmatprep.subr.bf16.mxu0 0
        %1038 = vmatpush1.bf16.msra.mxu0 0
        %1039 = vmatprep.subr.bf16.mxu0 0
        %1040 = vmatpush1.bf16.msra.mxu0 0
        %1041 = vmatprep.subr.bf16.mxu0 0
        %1042 = vmatpush1.bf16.msra.mxu0 0
        %1043 = vmatprep.subr.bf16.mxu0 0
        %1044 = vmatpush1.bf16.msra.mxu0 0
        %1045 = vmatprep.subr.bf16.mxu0 0
        %1046 = vmatpush1.bf16.msra.mxu0 0
        %1047 = vmatprep.subr.bf16.mxu0 0
        %1048 = vmatpush1.bf16.msra.mxu0 0
        %1049 = vmatprep.subr.bf16.mxu0 0
        %1050 = vmatpush1.bf16.msra.mxu0 0
        %1051 = vmatprep.subr.bf16.mxu0 0
        %1052 = vmatpush1.bf16.msra.mxu0 0
        %1053 = vmatprep.subr.bf16.mxu0 0
        %1054 = vmatpush1.bf16.msra.mxu0 0
        %1055 = vmatprep.mubr.bf16.mxu0 0
        %1056 = vmatmul.mubr.bf16.gmra.mrb[0].mxu0 %v969
        %v1057 = vpop.f32.mrb[0].mxu0
        %v1058 = vadd.f32 %v943, %v1057
        %v1059 = vpop.f32.mrb[0].mxu0
        %v1060 = vpop.f32.mrb[0].mxu0
        %v1061 = vpop.f32.mrb[0].mxu0
        %1062 = vdwg.mxu0
        %v1067 = vunpack.c.l.b16 %v919
        %v1068 = vunpack.c.l.b16 %v920
        %v1069 = vunpack.c.l.b16 %v921
        %v1070 = vunpack.c.l.b16 %v922
        %v1071 = vpack.c.b16 %v1068, %v1067
        %v1072 = vpack.c.b16 %v1070, %v1069
        %1075 = vmatprep.subr.bf16.mxu0 0
        %1076 = vmatpush1.bf16.msra.mxu0 %v1071
        %1077 = vmatprep.subr.bf16.mxu0 0
        %1078 = vmatpush1.bf16.msra.mxu0 %v1072
        %1079 = vmatprep.subr.bf16.mxu0 0
        %1080 = vmatpush1.bf16.msra.mxu0 0
        %1081 = vmatprep.subr.bf16.mxu0 0
        %1082 = vmatpush1.bf16.msra.mxu0 0
        %1083 = vmatprep.subr.bf16.mxu0 0
        %1084 = vmatpush1.bf16.msra.mxu0 0
        %1085 = vmatprep.subr.bf16.mxu0 0
        %1086 = vmatpush1.bf16.msra.mxu0 0
        %1087 = vmatprep.subr.bf16.mxu0 0
        %1088 = vmatpush1.bf16.msra.mxu0 0
        %1089 = vmatprep.subr.bf16.mxu0 0
        %1090 = vmatpush1.bf16.msra.mxu0 0
        %1091 = vmatprep.subr.bf16.mxu0 0
        %1092 = vmatpush1.bf16.msra.mxu0 0
        %1093 = vmatprep.subr.bf16.mxu0 0
        %1094 = vmatpush1.bf16.msra.mxu0 0
        %1095 = vmatprep.subr.bf16.mxu0 0
        %1096 = vmatpush1.bf16.msra.mxu0 0
        %1097 = vmatprep.subr.bf16.mxu0 0
        %1098 = vmatpush1.bf16.msra.mxu0 0
        %1099 = vmatprep.subr.bf16.mxu0 0
        %1100 = vmatpush1.bf16.msra.mxu0 0
        %1101 = vmatprep.subr.bf16.mxu0 0
        %1102 = vmatpush1.bf16.msra.mxu0 0
        %1103 = vmatprep.subr.bf16.mxu0 0
        %1104 = vmatpush1.bf16.msra.mxu0 0
        %1105 = vmatprep.subr.bf16.mxu0 0
        %1106 = vmatpush1.bf16.msra.mxu0 0
        %1107 = vmatprep.mubr.bf16.mxu0 0
        %1108 = vmatmul.mubr.bf16.gmra.mrb[0].mxu0 %v969
        %v1109 = vpop.f32.mrb[0].mxu0
        %v1110 = vadd.f32 %v947, %v1109
        %v1111 = vpop.f32.mrb[0].mxu0
        %v1112 = vpop.f32.mrb[0].mxu0
        %v1113 = vpop.f32.mrb[0].mxu0
        %1114 = vdwg.mxu0
        %v1119 = vunpack.c.l.b16 %v923
        %v1120 = vunpack.c.l.b16 %v924
        %v1121 = vunpack.c.l.b16 %v925
        %v1122 = vunpack.c.l.b16 %v926
        %v1123 = vpack.c.b16 %v1120, %v1119
        %v1124 = vpack.c.b16 %v1122, %v1121
        %1127 = vmatprep.subr.bf16.mxu0 0
        %1128 = vmatpush1.bf16.msra.mxu0 %v1123
        %1129 = vmatprep.subr.bf16.mxu0 0
        %1130 = vmatpush1.bf16.msra.mxu0 %v1124
        %1131 = vmatprep.subr.bf16.mxu0 0
        %1132 = vmatpush1.bf16.msra.mxu0 0
        %1133 = vmatprep.subr.bf16.mxu0 0
        %1134 = vmatpush1.bf16.msra.mxu0 0
        %1135 = vmatprep.subr.bf16.mxu0 0
        %1136 = vmatpush1.bf16.msra.mxu0 0
        %1137 = vmatprep.subr.bf16.mxu0 0
        %1138 = vmatpush1.bf16.msra.mxu0 0
        %1139 = vmatprep.subr.bf16.mxu0 0
        %1140 = vmatpush1.bf16.msra.mxu0 0
        %1141 = vmatprep.subr.bf16.mxu0 0
        %1142 = vmatpush1.bf16.msra.mxu0 0
        %1143 = vmatprep.subr.bf16.mxu0 0
        %1144 = vmatpush1.bf16.msra.mxu0 0
        %1145 = vmatprep.subr.bf16.mxu0 0
        %1146 = vmatpush1.bf16.msra.mxu0 0
        %1147 = vmatprep.subr.bf16.mxu0 0
        %1148 = vmatpush1.bf16.msra.mxu0 0
        %1149 = vmatprep.subr.bf16.mxu0 0
        %1150 = vmatpush1.bf16.msra.mxu0 0
        %1151 = vmatprep.subr.bf16.mxu0 0
        %1152 = vmatpush1.bf16.msra.mxu0 0
        %1153 = vmatprep.subr.bf16.mxu0 0
        %1154 = vmatpush1.bf16.msra.mxu0 0
        %1155 = vmatprep.subr.bf16.mxu0 0
        %1156 = vmatpush1.bf16.msra.mxu0 0
        %1157 = vmatprep.subr.bf16.mxu0 0
        %1158 = vmatpush1.bf16.msra.mxu0 0
        %1159 = vmatprep.mubr.bf16.mxu0 0
        %1160 = vmatmul.mubr.bf16.gmra.mrb[0].mxu0 %v969
        %v1161 = vpop.f32.mrb[0].mxu0
        %v1162 = vadd.f32 %v951, %v1161
        %v1163 = vpop.f32.mrb[0].mxu0
        %v1164 = vpop.f32.mrb[0].mxu0
        %v1165 = vpop.f32.mrb[0].mxu0
        %1166 = vdwg.mxu0
        %v1167 = vmul.f32 %v1006, 0.17677669
        %v1168 = vmul.f32 %v1058, 0.17677669
        %v1169 = vmul.f32 %v1110, 0.17677669
        %v1170 = vmul.f32 %v1162, 0.17677669
        %v1171 = vpack.c.bf16 %v1167, %v1167
        %v1172 = vpack.c.bf16 %v1168, %v1168
        %v1173 = vpack.c.bf16 %v1169, %v1169
        %v1174 = vpack.c.bf16 %v1170, %v1170
        %v1175 = vpack.c.bf16 %v749, %v749
        %v1176 = vpack.c.bf16 %v801, %v801
        %v1177 = vpack.c.bf16 %v853, %v853
        %v1178 = vpack.c.bf16 %v905, %v905
        %vm1179 = vcmask 64512
        %v1181 = vsel %vm1179, %v1171, 0
        %v1184 = vsel %vm1179, %v1175, 0
        %1186 = vmatprep.subr.bf16.mxu0 0
        %1187 = vmatpush1.bf16.xpose.msra.mxu0 %v1184
        %1188 = vmatprep.subr.bf16.mxu0 0
        %1189 = vmatpush1.bf16.xpose.msra.mxu0 0
        %1190 = vmatprep.subr.bf16.mxu0 0
        %1191 = vmatpush1.bf16.xpose.msra.mxu0 0
        %1192 = vmatprep.subr.bf16.mxu0 0
        %1193 = vmatpush1.bf16.xpose.msra.mxu0 0
        %1194 = vmatprep.subr.bf16.mxu0 0
        %1195 = vmatpush1.bf16.xpose.msra.mxu0 0
        %1196 = vmatprep.subr.bf16.mxu0 0
        %1197 = vmatpush1.bf16.xpose.msra.mxu0 0
        %1198 = vmatprep.subr.bf16.mxu0 0
        %1199 = vmatpush1.bf16.xpose.msra.mxu0 0
        %1200 = vmatprep.subr.bf16.mxu0 0
        %1201 = vmatpush1.bf16.xpose.msra.mxu0 0
        %1202 = vmatprep.subr.bf16.mxu0 0
        %1203 = vmatpush1.bf16.xpose.msra.mxu0 0
        %1204 = vmatprep.subr.bf16.mxu0 0
        %1205 = vmatpush1.bf16.xpose.msra.mxu0 0
        %1206 = vmatprep.subr.bf16.mxu0 0
        %1207 = vmatpush1.bf16.xpose.msra.mxu0 0
        %1208 = vmatprep.subr.bf16.mxu0 0
        %1209 = vmatpush1.bf16.xpose.msra.mxu0 0
        %1210 = vmatprep.subr.bf16.mxu0 0
        %1211 = vmatpush1.bf16.xpose.msra.mxu0 0
        %1212 = vmatprep.subr.bf16.mxu0 0
        %1213 = vmatpush1.bf16.xpose.msra.mxu0 0
        %1214 = vmatprep.subr.bf16.mxu0 0
        %1215 = vmatpush1.bf16.xpose.msra.mxu0 0
        %1216 = vmatprep.subr.bf16.mxu0 0
        %1217 = vmatpush1.bf16.xpose.msra.mxu0 0
        %1218 = vmatprep.mubr.bf16.mxu0 0
        %1219 = vmatmul.mubr.bf16.gmra.mrb[0].mxu0 %v1181
        %v1220 = vpop.f32.mrb[0].mxu0
        %v1221 = vadd.f32 0.0, %v1220
        %v1222 = vpop.f32.mrb[0].mxu0
        %v1223 = vpop.f32.mrb[0].mxu0
        %v1224 = vpop.f32.mrb[0].mxu0
        %1225 = vdwg.mxu0
        %v1227 = vsel %vm1179, %v1172, 0
        %v1230 = vsel %vm1179, %v1176, 0
        %1232 = vmatprep.subr.bf16.mxu0 0
        %1233 = vmatpush1.bf16.xpose.msra.mxu0 %v1230
        %1234 = vmatprep.subr.bf16.mxu0 0
        %1235 = vmatpush1.bf16.xpose.msra.mxu0 0
        %1236 = vmatprep.subr.bf16.mxu0 0
        %1237 = vmatpush1.bf16.xpose.msra.mxu0 0
        %1238 = vmatprep.subr.bf16.mxu0 0
        %1239 = vmatpush1.bf16.xpose.msra.mxu0 0
        %1240 = vmatprep.subr.bf16.mxu0 0
        %1241 = vmatpush1.bf16.xpose.msra.mxu0 0
        %1242 = vmatprep.subr.bf16.mxu0 0
        %1243 = vmatpush1.bf16.xpose.msra.mxu0 0
        %1244 = vmatprep.subr.bf16.mxu0 0
        %1245 = vmatpush1.bf16.xpose.msra.mxu0 0
        %1246 = vmatprep.subr.bf16.mxu0 0
        %1247 = vmatpush1.bf16.xpose.msra.mxu0 0
        %1248 = vmatprep.subr.bf16.mxu0 0
        %1249 = vmatpush1.bf16.xpose.msra.mxu0 0
        %1250 = vmatprep.subr.bf16.mxu0 0
        %1251 = vmatpush1.bf16.xpose.msra.mxu0 0
        %1252 = vmatprep.subr.bf16.mxu0 0
        %1253 = vmatpush1.bf16.xpose.msra.mxu0 0
        %1254 = vmatprep.subr.bf16.mxu0 0
        %1255 = vmatpush1.bf16.xpose.msra.mxu0 0
        %1256 = vmatprep.subr.bf16.mxu0 0
        %1257 = vmatpush1.bf16.xpose.msra.mxu0 0
        %1258 = vmatprep.subr.bf16.mxu0 0
        %1259 = vmatpush1.bf16.xpose.msra.mxu0 0
        %1260 = vmatprep.subr.bf16.mxu0 0
        %1261 = vmatpush1.bf16.xpose.msra.mxu0 0
        %1262 = vmatprep.subr.bf16.mxu0 0
        %1263 = vmatpush1.bf16.xpose.msra.mxu0 0
        %1264 = vmatprep.mubr.bf16.mxu0 0
        %1265 = vmatmul.mubr.bf16.gmra.mrb[0].mxu0 %v1227
        %v1266 = vpop.f32.mrb[0].mxu0
        %v1267 = vadd.f32 0.0, %v1266
        %v1268 = vpop.f32.mrb[0].mxu0
        %v1269 = vpop.f32.mrb[0].mxu0
        %v1270 = vpop.f32.mrb[0].mxu0
        %1271 = vdwg.mxu0
        %v1273 = vsel %vm1179, %v1173, 0
        %v1276 = vsel %vm1179, %v1177, 0
        %1278 = vmatprep.subr.bf16.mxu0 0
        %1279 = vmatpush1.bf16.xpose.msra.mxu0 %v1276
        %1280 = vmatprep.subr.bf16.mxu0 0
        %1281 = vmatpush1.bf16.xpose.msra.mxu0 0
        %1282 = vmatprep.subr.bf16.mxu0 0
        %1283 = vmatpush1.bf16.xpose.msra.mxu0 0
        %1284 = vmatprep.subr.bf16.mxu0 0
        %1285 = vmatpush1.bf16.xpose.msra.mxu0 0
        %1286 = vmatprep.subr.bf16.mxu0 0
        %1287 = vmatpush1.bf16.xpose.msra.mxu0 0
        %1288 = vmatprep.subr.bf16.mxu0 0
        %1289 = vmatpush1.bf16.xpose.msra.mxu0 0
        %1290 = vmatprep.subr.bf16.mxu0 0
        %1291 = vmatpush1.bf16.xpose.msra.mxu0 0
        %1292 = vmatprep.subr.bf16.mxu0 0
        %1293 = vmatpush1.bf16.xpose.msra.mxu0 0
        %1294 = vmatprep.subr.bf16.mxu0 0
        %1295 = vmatpush1.bf16.xpose.msra.mxu0 0
        %1296 = vmatprep.subr.bf16.mxu0 0
        %1297 = vmatpush1.bf16.xpose.msra.mxu0 0
        %1298 = vmatprep.subr.bf16.mxu0 0
        %1299 = vmatpush1.bf16.xpose.msra.mxu0 0
        %1300 = vmatprep.subr.bf16.mxu0 0
        %1301 = vmatpush1.bf16.xpose.msra.mxu0 0
        %1302 = vmatprep.subr.bf16.mxu0 0
        %1303 = vmatpush1.bf16.xpose.msra.mxu0 0
        %1304 = vmatprep.subr.bf16.mxu0 0
        %1305 = vmatpush1.bf16.xpose.msra.mxu0 0
        %1306 = vmatprep.subr.bf16.mxu0 0
        %1307 = vmatpush1.bf16.xpose.msra.mxu0 0
        %1308 = vmatprep.subr.bf16.mxu0 0
        %1309 = vmatpush1.bf16.xpose.msra.mxu0 0
        %1310 = vmatprep.mubr.bf16.mxu0 0
        %1311 = vmatmul.mubr.bf16.gmra.mrb[0].mxu0 %v1273
        %v1312 = vpop.f32.mrb[0].mxu0
        %v1313 = vadd.f32 0.0, %v1312
        %v1314 = vpop.f32.mrb[0].mxu0
        %v1315 = vpop.f32.mrb[0].mxu0
        %v1316 = vpop.f32.mrb[0].mxu0
        %1317 = vdwg.mxu0
        %v1319 = vsel %vm1179, %v1174, 0
        %v1322 = vsel %vm1179, %v1178, 0
        %1324 = vmatprep.subr.bf16.mxu0 0
        %1325 = vmatpush1.bf16.xpose.msra.mxu0 %v1322
        %1326 = vmatprep.subr.bf16.mxu0 0
        %1327 = vmatpush1.bf16.xpose.msra.mxu0 0
        %1328 = vmatprep.subr.bf16.mxu0 0
        %1329 = vmatpush1.bf16.xpose.msra.mxu0 0
        %1330 = vmatprep.subr.bf16.mxu0 0
        %1331 = vmatpush1.bf16.xpose.msra.mxu0 0
        %1332 = vmatprep.subr.bf16.mxu0 0
        %1333 = vmatpush1.bf16.xpose.msra.mxu0 0
        %1334 = vmatprep.subr.bf16.mxu0 0
        %1335 = vmatpush1.bf16.xpose.msra.mxu0 0
        %1336 = vmatprep.subr.bf16.mxu0 0
        %1337 = vmatpush1.bf16.xpose.msra.mxu0 0
        %1338 = vmatprep.subr.bf16.mxu0 0
        %1339 = vmatpush1.bf16.xpose.msra.mxu0 0
        %1340 = vmatprep.subr.bf16.mxu0 0
        %1341 = vmatpush1.bf16.xpose.msra.mxu0 0
        %1342 = vmatprep.subr.bf16.mxu0 0
        %1343 = vmatpush1.bf16.xpose.msra.mxu0 0
        %1344 = vmatprep.subr.bf16.mxu0 0
        %1345 = vmatpush1.bf16.xpose.msra.mxu0 0
        %1346 = vmatprep.subr.bf16.mxu0 0
        %1347 = vmatpush1.bf16.xpose.msra.mxu0 0
        %1348 = vmatprep.subr.bf16.mxu0 0
        %1349 = vmatpush1.bf16.xpose.msra.mxu0 0
        %1350 = vmatprep.subr.bf16.mxu0 0
        %1351 = vmatpush1.bf16.xpose.msra.mxu0 0
        %1352 = vmatprep.subr.bf16.mxu0 0
        %1353 = vmatpush1.bf16.xpose.msra.mxu0 0
        %1354 = vmatprep.subr.bf16.mxu0 0
        %1355 = vmatpush1.bf16.xpose.msra.mxu0 0
        %1356 = vmatprep.mubr.bf16.mxu0 0
        %1357 = vmatmul.mubr.bf16.gmra.mrb[0].mxu0 %v1319
        %v1358 = vpop.f32.mrb[0].mxu0
        %v1359 = vadd.f32 0.0, %v1358
        %v1360 = vpop.f32.mrb[0].mxu0
        %v1361 = vpop.f32.mrb[0].mxu0
        %v1362 = vpop.f32.mrb[0].mxu0
        %1363 = vdwg.mxu0
        %v1364 = vld [vmem:[%s387] sm:$0x3]
        %vm1365 = vnez %v1364
        %v1366 = vsel %vm1365, 16843009, 0
        %v1367 = vunpack.c.0.s8 %v1366
        %vm1368 = vcmp.ne.s32.totalorder %v1367, 0
        %v1369 = vsel %vm1368, 1, 0
        %vm1370 = vcmp.eq.s32.totalorder %v1369, 1
        %v1371 = vsel %vm1370, %v1221, -1e+20
        %v1372 = vsel %vm1370, %v1267, -1e+20
        %v1373 = vsel %vm1370, %v1313, -1e+20
        %v1374 = vsel %vm1370, %v1359, -1e+20
        %v1375 = vsel %vm1179, %v1371, -inf
        %1376 = vmax.xlane.f32.xlu0 %v1375
        %v1377 = vpop.xlane.xlu0 %1376
        %v1378 = vsel %vm1179, %v1372, -inf
        %1379 = vmax.xlane.f32.xlu0 %v1378
        %v1380 = vpop.xlane.xlu0 %1379
        %v1381 = vsel %vm1179, %v1373, -inf
        %1382 = vmax.xlane.f32.xlu0 %v1381
        %v1383 = vpop.xlane.xlu0 %1382
        %v1384 = vsel %vm1179, %v1374, -inf
        %1385 = vmax.xlane.f32.xlu0 %v1384
        %v1386 = vpop.xlane.xlu0 %1385
        %v1387 = vsub.f32 %v1371, %v1377
        %v1388 = vsub.f32 %v1372, %v1380
        %v1389 = vsub.f32 %v1373, %v1383
        %v1390 = vsub.f32 %v1374, %v1386
        %v1391 = vmul.f32 %v1387, 1.442695
        %v1392 = vpow.pop %v1391
        %v1393 = vmul.f32 %v1388, 1.442695
        %v1394 = vpow.pop %v1393
        %v1395 = vmul.f32 %v1389, 1.442695
        %v1396 = vpow.pop %v1395
        %v1397 = vmul.f32 %v1390, 1.442695
        %v1398 = vpow.pop %v1397
        %v1399 = vsel %vm1179, %v1392, 0.0
        %1400 = vadd.xlane.f32.xlu0 %v1399
        %v1401 = vpop.xlane.xlu0 %1400
        %v1402 = vsel %vm1179, %v1394, 0.0
        %1403 = vadd.xlane.f32.xlu0 %v1402
        %v1404 = vpop.xlane.xlu0 %1403
        %v1405 = vsel %vm1179, %v1396, 0.0
        %1406 = vadd.xlane.f32.xlu0 %v1405
        %v1407 = vpop.xlane.xlu0 %1406
        %v1408 = vsel %vm1179, %v1398, 0.0
        %1409 = vadd.xlane.f32.xlu0 %v1408
        %v1410 = vpop.xlane.xlu0 %1409
        %v1411 = vrcp.pop %v1401
        %v1412 = vrcp.pop %v1404
        %v1413 = vrcp.pop %v1407
        %v1414 = vrcp.pop %v1410
        %v1415 = vmul.f32 %v1392, %v1411
        %v1416 = vmul.f32 %v1394, %v1412
        %v1417 = vmul.f32 %v1396, %v1413
        %v1418 = vmul.f32 %v1398, %v1414
        %v1419 = vpack.c.bf16 %v1415, %v1415
        %v1420 = vpack.c.bf16 %v1416, %v1416
        %v1421 = vpack.c.bf16 %v1417, %v1417
        %v1422 = vpack.c.bf16 %v1418, %v1418
        %v1423 = vpack.c.bf16 %v492, %v492
        %v1424 = vpack.c.bf16 %v544, %v544
        %v1425 = vpack.c.bf16 %v596, %v596
        %v1426 = vpack.c.bf16 %v648, %v648
        %v1428 = vsel %vm1179, %v1419, 0
        %vm1430 = vcmask 1043456
        %v1432 = vsel %vm1430, %v1423, 0
        %1434 = vmatprep.subr.bf16.mxu0 0
        %1435 = vmatpush1.bf16.msra.mxu0 %v1432
        %1436 = vmatprep.subr.bf16.mxu0 0
        %1437 = vmatpush1.bf16.msra.mxu0 0
        %1438 = vmatprep.subr.bf16.mxu0 0
        %1439 = vmatpush1.bf16.msra.mxu0 0
        %1440 = vmatprep.subr.bf16.mxu0 0
        %1441 = vmatpush1.bf16.msra.mxu0 0
        %1442 = vmatprep.subr.bf16.mxu0 0
        %1443 = vmatpush1.bf16.msra.mxu0 0
        %1444 = vmatprep.subr.bf16.mxu0 0
        %1445 = vmatpush1.bf16.msra.mxu0 0
        %1446 = vmatprep.subr.bf16.mxu0 0
        %1447 = vmatpush1.bf16.msra.mxu0 0
        %1448 = vmatprep.subr.bf16.mxu0 0
        %1449 = vmatpush1.bf16.msra.mxu0 0
        %1450 = vmatprep.subr.bf16.mxu0 0
        %1451 = vmatpush1.bf16.msra.mxu0 0
        %1452 = vmatprep.subr.bf16.mxu0 0
        %1453 = vmatpush1.bf16.msra.mxu0 0
        %1454 = vmatprep.subr.bf16.mxu0 0
        %1455 = vmatpush1.bf16.msra.mxu0 0
        %1456 = vmatprep.subr.bf16.mxu0 0
        %1457 = vmatpush1.bf16.msra.mxu0 0
        %1458 = vmatprep.subr.bf16.mxu0 0
        %1459 = vmatpush1.bf16.msra.mxu0 0
        %1460 = vmatprep.subr.bf16.mxu0 0
        %1461 = vmatpush1.bf16.msra.mxu0 0
        %1462 = vmatprep.subr.bf16.mxu0 0
        %1463 = vmatpush1.bf16.msra.mxu0 0
        %1464 = vmatprep.subr.bf16.mxu0 0
        %1465 = vmatpush1.bf16.msra.mxu0 0
        %1466 = vmatprep.mubr.bf16.mxu0 0
        %1467 = vmatmul.mubr.bf16.gmra.mrb[0].mxu0 %v1428
        %v1468 = vpop.f32.mrb[0].mxu0
        %v1469 = vadd.f32 0.0, %v1468
        %v1470 = vpop.f32.mrb[0].mxu0
        %v1471 = vpop.f32.mrb[0].mxu0
        %v1472 = vpop.f32.mrb[0].mxu0
        %1473 = vdwg.mxu0
        %v1475 = vsel %vm1179, %v1420, 0
        %v1478 = vsel %vm1430, %v1424, 0
        %1480 = vmatprep.subr.bf16.mxu0 0
        %1481 = vmatpush1.bf16.msra.mxu0 %v1478
        %1482 = vmatprep.subr.bf16.mxu0 0
        %1483 = vmatpush1.bf16.msra.mxu0 0
        %1484 = vmatprep.subr.bf16.mxu0 0
        %1485 = vmatpush1.bf16.msra.mxu0 0
        %1486 = vmatprep.subr.bf16.mxu0 0
        %1487 = vmatpush1.bf16.msra.mxu0 0
        %1488 = vmatprep.subr.bf16.mxu0 0
        %1489 = vmatpush1.bf16.msra.mxu0 0
        %1490 = vmatprep.subr.bf16.mxu0 0
        %1491 = vmatpush1.bf16.msra.mxu0 0
        %1492 = vmatprep.subr.bf16.mxu0 0
        %1493 = vmatpush1.bf16.msra.mxu0 0
        %1494 = vmatprep.subr.bf16.mxu0 0
        %1495 = vmatpush1.bf16.msra.mxu0 0
        %1496 = vmatprep.subr.bf16.mxu0 0
        %1497 = vmatpush1.bf16.msra.mxu0 0
        %1498 = vmatprep.subr.bf16.mxu0 0
        %1499 = vmatpush1.bf16.msra.mxu0 0
        %1500 = vmatprep.subr.bf16.mxu0 0
        %1501 = vmatpush1.bf16.msra.mxu0 0
        %1502 = vmatprep.subr.bf16.mxu0 0
        %1503 = vmatpush1.bf16.msra.mxu0 0
        %1504 = vmatprep.subr.bf16.mxu0 0
        %1505 = vmatpush1.bf16.msra.mxu0 0
        %1506 = vmatprep.subr.bf16.mxu0 0
        %1507 = vmatpush1.bf16.msra.mxu0 0
        %1508 = vmatprep.subr.bf16.mxu0 0
        %1509 = vmatpush1.bf16.msra.mxu0 0
        %1510 = vmatprep.subr.bf16.mxu0 0
        %1511 = vmatpush1.bf16.msra.mxu0 0
        %1512 = vmatprep.mubr.bf16.mxu0 0
        %1513 = vmatmul.mubr.bf16.gmra.mrb[0].mxu0 %v1475
        %v1514 = vpop.f32.mrb[0].mxu0
        %v1515 = vadd.f32 0.0, %v1514
        %v1516 = vpop.f32.mrb[0].mxu0
        %v1517 = vpop.f32.mrb[0].mxu0
        %v1518 = vpop.f32.mrb[0].mxu0
        %1519 = vdwg.mxu0
        %v1521 = vsel %vm1179, %v1421, 0
        %v1524 = vsel %vm1430, %v1425, 0
        %1526 = vmatprep.subr.bf16.mxu0 0
        %1527 = vmatpush1.bf16.msra.mxu0 %v1524
        %1528 = vmatprep.subr.bf16.mxu0 0
        %1529 = vmatpush1.bf16.msra.mxu0 0
        %1530 = vmatprep.subr.bf16.mxu0 0
        %1531 = vmatpush1.bf16.msra.mxu0 0
        %1532 = vmatprep.subr.bf16.mxu0 0
        %1533 = vmatpush1.bf16.msra.mxu0 0
        %1534 = vmatprep.subr.bf16.mxu0 0
        %1535 = vmatpush1.bf16.msra.mxu0 0
        %1536 = vmatprep.subr.bf16.mxu0 0
        %1537 = vmatpush1.bf16.msra.mxu0 0
        %1538 = vmatprep.subr.bf16.mxu0 0
        %1539 = vmatpush1.bf16.msra.mxu0 0
        %1540 = vmatprep.subr.bf16.mxu0 0
        %1541 = vmatpush1.bf16.msra.mxu0 0
        %1542 = vmatprep.subr.bf16.mxu0 0
        %1543 = vmatpush1.bf16.msra.mxu0 0
        %1544 = vmatprep.subr.bf16.mxu0 0
        %1545 = vmatpush1.bf16.msra.mxu0 0
        %1546 = vmatprep.subr.bf16.mxu0 0
        %1547 = vmatpush1.bf16.msra.mxu0 0
        %1548 = vmatprep.subr.bf16.mxu0 0
        %1549 = vmatpush1.bf16.msra.mxu0 0
        %1550 = vmatprep.subr.bf16.mxu0 0
        %1551 = vmatpush1.bf16.msra.mxu0 0
        %1552 = vmatprep.subr.bf16.mxu0 0
        %1553 = vmatpush1.bf16.msra.mxu0 0
        %1554 = vmatprep.subr.bf16.mxu0 0
        %1555 = vmatpush1.bf16.msra.mxu0 0
        %1556 = vmatprep.subr.bf16.mxu0 0
        %1557 = vmatpush1.bf16.msra.mxu0 0
        %1558 = vmatprep.mubr.bf16.mxu0 0
        %1559 = vmatmul.mubr.bf16.gmra.mrb[0].mxu0 %v1521
        %v1560 = vpop.f32.mrb[0].mxu0
        %v1561 = vadd.f32 0.0, %v1560
        %v1562 = vpop.f32.mrb[0].mxu0
        %v1563 = vpop.f32.mrb[0].mxu0
        %v1564 = vpop.f32.mrb[0].mxu0
        %1565 = vdwg.mxu0
        %v1567 = vsel %vm1179, %v1422, 0
        %v1570 = vsel %vm1430, %v1426, 0
        %1572 = vmatprep.subr.bf16.mxu0 0
        %1573 = vmatpush1.bf16.msra.mxu0 %v1570
        %1574 = vmatprep.subr.bf16.mxu0 0
        %1575 = vmatpush1.bf16.msra.mxu0 0
        %1576 = vmatprep.subr.bf16.mxu0 0
        %1577 = vmatpush1.bf16.msra.mxu0 0
        %1578 = vmatprep.subr.bf16.mxu0 0
        %1579 = vmatpush1.bf16.msra.mxu0 0
        %1580 = vmatprep.subr.bf16.mxu0 0
        %1581 = vmatpush1.bf16.msra.mxu0 0
        %1582 = vmatprep.subr.bf16.mxu0 0
        %1583 = vmatpush1.bf16.msra.mxu0 0
        %1584 = vmatprep.subr.bf16.mxu0 0
        %1585 = vmatpush1.bf16.msra.mxu0 0
        %1586 = vmatprep.subr.bf16.mxu0 0
        %1587 = vmatpush1.bf16.msra.mxu0 0
        %1588 = vmatprep.subr.bf16.mxu0 0
        %1589 = vmatpush1.bf16.msra.mxu0 0
        %1590 = vmatprep.subr.bf16.mxu0 0
        %1591 = vmatpush1.bf16.msra.mxu0 0
        %1592 = vmatprep.subr.bf16.mxu0 0
        %1593 = vmatpush1.bf16.msra.mxu0 0
        %1594 = vmatprep.subr.bf16.mxu0 0
        %1595 = vmatpush1.bf16.msra.mxu0 0
        %1596 = vmatprep.subr.bf16.mxu0 0
        %1597 = vmatpush1.bf16.msra.mxu0 0
        %1598 = vmatprep.subr.bf16.mxu0 0
        %1599 = vmatpush1.bf16.msra.mxu0 0
        %1600 = vmatprep.subr.bf16.mxu0 0
        %1601 = vmatpush1.bf16.msra.mxu0 0
        %1602 = vmatprep.subr.bf16.mxu0 0
        %1603 = vmatpush1.bf16.msra.mxu0 0
        %1604 = vmatprep.mubr.bf16.mxu0 0
        %1605 = vmatmul.mubr.bf16.gmra.mrb[0].mxu0 %v1567
        %v1606 = vpop.f32.mrb[0].mxu0
        %v1607 = vadd.f32 0.0, %v1606
        %v1608 = vpop.f32.mrb[0].mxu0
        %v1609 = vpop.f32.mrb[0].mxu0
        %v1610 = vpop.f32.mrb[0].mxu0
        %1611 = vdwg.mxu0
        %v1612 = vpack.c.bf16 %v1469, %v1469
        %v1613 = vpack.c.bf16 %v1515, %v1515
        %v1614 = vpack.c.bf16 %v1561, %v1561
        %v1615 = vpack.c.bf16 %v1607, %v1607
        %v1616 = vld [vmem:[%s6] sm:$0xf]
        %v1617 = vld [vmem:[%s6 + $0x4] sm:$0xf]
        %v1618 = vld [vmem:[%s6 + $0x8] sm:$0xf]
        %v1619 = vld [vmem:[%s6 + $0xc] sm:$0xf]
        %v1621 = vsel %vm1179, %v1612, 0
        %v1624 = vsel %vm1430, %v1616, 0
        %1626 = vmatprep.subr.bf16.mxu0 0
        %1627 = vmatpush1.bf16.msra.mxu0 %v1624
        %1628 = vmatprep.subr.bf16.mxu0 0
        %1629 = vmatpush1.bf16.msra.mxu0 0
        %1630 = vmatprep.subr.bf16.mxu0 0
        %1631 = vmatpush1.bf16.msra.mxu0 0
        %1632 = vmatprep.subr.bf16.mxu0 0
        %1633 = vmatpush1.bf16.msra.mxu0 0
        %1634 = vmatprep.subr.bf16.mxu0 0
        %1635 = vmatpush1.bf16.msra.mxu0 0
        %1636 = vmatprep.subr.bf16.mxu0 0
        %1637 = vmatpush1.bf16.msra.mxu0 0
        %1638 = vmatprep.subr.bf16.mxu0 0
        %1639 = vmatpush1.bf16.msra.mxu0 0
        %1640 = vmatprep.subr.bf16.mxu0 0
        %1641 = vmatpush1.bf16.msra.mxu0 0
        %1642 = vmatprep.subr.bf16.mxu0 0
        %1643 = vmatpush1.bf16.msra.mxu0 0
        %1644 = vmatprep.subr.bf16.mxu0 0
        %1645 = vmatpush1.bf16.msra.mxu0 0
        %1646 = vmatprep.subr.bf16.mxu0 0
        %1647 = vmatpush1.bf16.msra.mxu0 0
        %1648 = vmatprep.subr.bf16.mxu0 0
        %1649 = vmatpush1.bf16.msra.mxu0 0
        %1650 = vmatprep.subr.bf16.mxu0 0
        %1651 = vmatpush1.bf16.msra.mxu0 0
        %1652 = vmatprep.subr.bf16.mxu0 0
        %1653 = vmatpush1.bf16.msra.mxu0 0
        %1654 = vmatprep.subr.bf16.mxu0 0
        %1655 = vmatpush1.bf16.msra.mxu0 0
        %1656 = vmatprep.subr.bf16.mxu0 0
        %1657 = vmatpush1.bf16.msra.mxu0 0
        %1658 = vmatprep.mubr.bf16.mxu0 0
        %1659 = vmatmul.mubr.bf16.gmra.mrb[0].mxu0 %v1621
        %v1660 = vpop.f32.mrb[0].mxu0
        %v1661 = vadd.f32 0.0, %v1660
        %v1662 = vpop.f32.mrb[0].mxu0
        %v1663 = vpop.f32.mrb[0].mxu0
        %v1664 = vpop.f32.mrb[0].mxu0
        %1665 = vdwg.mxu0
        %v1667 = vsel %vm1179, %v1613, 0
        %v1670 = vsel %vm1430, %v1617, 0
        %1672 = vmatprep.subr.bf16.mxu0 0
        %1673 = vmatpush1.bf16.msra.mxu0 %v1670
        %1674 = vmatprep.subr.bf16.mxu0 0
        %1675 = vmatpush1.bf16.msra.mxu0 0
        %1676 = vmatprep.subr.bf16.mxu0 0
        %1677 = vmatpush1.bf16.msra.mxu0 0
        %1678 = vmatprep.subr.bf16.mxu0 0
        %1679 = vmatpush1.bf16.msra.mxu0 0
        %1680 = vmatprep.subr.bf16.mxu0 0
        %1681 = vmatpush1.bf16.msra.mxu0 0
        %1682 = vmatprep.subr.bf16.mxu0 0
        %1683 = vmatpush1.bf16.msra.mxu0 0
        %1684 = vmatprep.subr.bf16.mxu0 0
        %1685 = vmatpush1.bf16.msra.mxu0 0
        %1686 = vmatprep.subr.bf16.mxu0 0
        %1687 = vmatpush1.bf16.msra.mxu0 0
        %1688 = vmatprep.subr.bf16.mxu0 0
        %1689 = vmatpush1.bf16.msra.mxu0 0
        %1690 = vmatprep.subr.bf16.mxu0 0
        %1691 = vmatpush1.bf16.msra.mxu0 0
        %1692 = vmatprep.subr.bf16.mxu0 0
        %1693 = vmatpush1.bf16.msra.mxu0 0
        %1694 = vmatprep.subr.bf16.mxu0 0
        %1695 = vmatpush1.bf16.msra.mxu0 0
        %1696 = vmatprep.subr.bf16.mxu0 0
        %1697 = vmatpush1.bf16.msra.mxu0 0
        %1698 = vmatprep.subr.bf16.mxu0 0
        %1699 = vmatpush1.bf16.msra.mxu0 0
        %1700 = vmatprep.subr.bf16.mxu0 0
        %1701 = vmatpush1.bf16.msra.mxu0 0
        %1702 = vmatprep.subr.bf16.mxu0 0
        %1703 = vmatpush1.bf16.msra.mxu0 0
        %1704 = vmatprep.mubr.bf16.mxu0 0
        %1705 = vmatmul.mubr.bf16.gmra.mrb[0].mxu0 %v1667
        %v1706 = vpop.f32.mrb[0].mxu0
        %v1707 = vadd.f32 0.0, %v1706
        %v1708 = vpop.f32.mrb[0].mxu0
        %v1709 = vpop.f32.mrb[0].mxu0
        %v1710 = vpop.f32.mrb[0].mxu0
        %1711 = vdwg.mxu0
        %v1713 = vsel %vm1179, %v1614, 0
        %v1716 = vsel %vm1430, %v1618, 0
        %1718 = vmatprep.subr.bf16.mxu0 0
        %1719 = vmatpush1.bf16.msra.mxu0 %v1716
        %1720 = vmatprep.subr.bf16.mxu0 0
        %1721 = vmatpush1.bf16.msra.mxu0 0
        %1722 = vmatprep.subr.bf16.mxu0 0
        %1723 = vmatpush1.bf16.msra.mxu0 0
        %1724 = vmatprep.subr.bf16.mxu0 0
        %1725 = vmatpush1.bf16.msra.mxu0 0
        %1726 = vmatprep.subr.bf16.mxu0 0
        %1727 = vmatpush1.bf16.msra.mxu0 0
        %1728 = vmatprep.subr.bf16.mxu0 0
        %1729 = vmatpush1.bf16.msra.mxu0 0
        %1730 = vmatprep.subr.bf16.mxu0 0
        %1731 = vmatpush1.bf16.msra.mxu0 0
        %1732 = vmatprep.subr.bf16.mxu0 0
        %1733 = vmatpush1.bf16.msra.mxu0 0
        %1734 = vmatprep.subr.bf16.mxu0 0
        %1735 = vmatpush1.bf16.msra.mxu0 0
        %1736 = vmatprep.subr.bf16.mxu0 0
        %1737 = vmatpush1.bf16.msra.mxu0 0
        %1738 = vmatprep.subr.bf16.mxu0 0
        %1739 = vmatpush1.bf16.msra.mxu0 0
        %1740 = vmatprep.subr.bf16.mxu0 0
        %1741 = vmatpush1.bf16.msra.mxu0 0
        %1742 = vmatprep.subr.bf16.mxu0 0
        %1743 = vmatpush1.bf16.msra.mxu0 0
        %1744 = vmatprep.subr.bf16.mxu0 0
        %1745 = vmatpush1.bf16.msra.mxu0 0
        %1746 = vmatprep.subr.bf16.mxu0 0
        %1747 = vmatpush1.bf16.msra.mxu0 0
        %1748 = vmatprep.subr.bf16.mxu0 0
        %1749 = vmatpush1.bf16.msra.mxu0 0
        %1750 = vmatprep.mubr.bf16.mxu0 0
        %1751 = vmatmul.mubr.bf16.gmra.mrb[0].mxu0 %v1713
        %v1752 = vpop.f32.mrb[0].mxu0
        %v1753 = vadd.f32 0.0, %v1752
        %v1754 = vpop.f32.mrb[0].mxu0
        %v1755 = vpop.f32.mrb[0].mxu0
        %v1756 = vpop.f32.mrb[0].mxu0
        %1757 = vdwg.mxu0
        %v1759 = vsel %vm1179, %v1615, 0
        %v1762 = vsel %vm1430, %v1619, 0
        %1764 = vmatprep.subr.bf16.mxu0 0
        %1765 = vmatpush1.bf16.msra.mxu0 %v1762
        %1766 = vmatprep.subr.bf16.mxu0 0
        %1767 = vmatpush1.bf16.msra.mxu0 0
        %1768 = vmatprep.subr.bf16.mxu0 0
        %1769 = vmatpush1.bf16.msra.mxu0 0
        %1770 = vmatprep.subr.bf16.mxu0 0
        %1771 = vmatpush1.bf16.msra.mxu0 0
        %1772 = vmatprep.subr.bf16.mxu0 0
        %1773 = vmatpush1.bf16.msra.mxu0 0
        %1774 = vmatprep.subr.bf16.mxu0 0
        %1775 = vmatpush1.bf16.msra.mxu0 0
        %1776 = vmatprep.subr.bf16.mxu0 0
        %1777 = vmatpush1.bf16.msra.mxu0 0
        %1778 = vmatprep.subr.bf16.mxu0 0
        %1779 = vmatpush1.bf16.msra.mxu0 0
        %1780 = vmatprep.subr.bf16.mxu0 0
        %1781 = vmatpush1.bf16.msra.mxu0 0
        %1782 = vmatprep.subr.bf16.mxu0 0
        %1783 = vmatpush1.bf16.msra.mxu0 0
        %1784 = vmatprep.subr.bf16.mxu0 0
        %1785 = vmatpush1.bf16.msra.mxu0 0
        %1786 = vmatprep.subr.bf16.mxu0 0
        %1787 = vmatpush1.bf16.msra.mxu0 0
        %1788 = vmatprep.subr.bf16.mxu0 0
        %1789 = vmatpush1.bf16.msra.mxu0 0
        %1790 = vmatprep.subr.bf16.mxu0 0
        %1791 = vmatpush1.bf16.msra.mxu0 0
        %1792 = vmatprep.subr.bf16.mxu0 0
        %1793 = vmatpush1.bf16.msra.mxu0 0
        %1794 = vmatprep.subr.bf16.mxu0 0
        %1795 = vmatpush1.bf16.msra.mxu0 0
        %1796 = vmatprep.mubr.bf16.mxu0 0
        %1797 = vmatmul.mubr.bf16.gmra.mrb[0].mxu0 %v1759
        %v1798 = vpop.f32.mrb[0].mxu0
        %v1799 = vadd.f32 0.0, %v1798
        %v1800 = vpop.f32.mrb[0].mxu0
        %v1801 = vpop.f32.mrb[0].mxu0
        %v1802 = vpop.f32.mrb[0].mxu0
        %1803 = vdwg.mxu0
        %v1804 = vsel %vm453, %v1661, 0.0
        %v1805 = vsel %vm453, %v1707, 0.0
        %v1806 = vadd.f32 %v1804, %v1805
        %v1807 = vsel %vm453, %v1753, 0.0
        %v1808 = vadd.f32 %v1806, %v1807
        %v1809 = vsel %vm453, %v1799, 0.0
        %v1810 = vadd.f32 %v1808, %v1809
        %v1811 = vld [vmem:[%s7] sm:$0x1]
        %v1813 = vlaneseq
        %v1814 = vshrl.u32 %v1813, 7
        %v1815 = vsub.s32 0, %v1814
        %v1816 = vrot.slane %v1811, %v1815
        %v1818 = vadd.f32 %v1810, %v1816
        %1819 = vst.msk [vmem:[%s365] sm:$0xff] %vm453, %v1818
        %s1820 = sand.u32 %s236, 1
        %s1821 = scalar_lea.sflag [#allocation3], %s1820
        %s1822 = sand.u32 %s236, 1
        %s1823 = smul.addr %s1822, 8
        %s1824 = scalar_lea.vmem [#allocation2], %s1823
        // Predicated region
        $region53: #{tpu_custom_call.1} parent=51 // pred_check
          %p1825 = pneg %p246
        $region54: #{tpu_custom_call.1} parent=51 // pred_check_branch
          %1827 = sbr.rel (%p1825) target = $region56
        $region55: #{tpu_custom_call.1} parent=51 // pred_region
          %s1829 = ssub.s32 128, 128
          %1830 = vsyncadd %s1821, %s1829
          %s1831 = sadd.s32 %s27, %s26
          %s1832 = smul.addr %s1831, 128
          %s1833 = scalar_lea.hbm %s8, %s1832
          %s1835 = sshll.u32 %s1824, 4
          %s1836 = int_to_ptr.vmem [resolvable:$true] %s1835
          %1838 = dma.vmem_to_hbm [thread:$0]  %s1836, 128, %s1833, %s1821
        $region56: #{tpu_custom_call.1} parent=51 // pred_fallthru
          _
      $region52: #{tpu_custom_call.1} parent=5 // pred_fallthru
        _
      %p1839 = scmp.le.s32.totalorder 2, %s17
      // Predicated region
      $region57: #{tpu_custom_call.1} parent=5 // pred_check
        %p1840 = pneg %p1839
      $region58: #{tpu_custom_call.1} parent=5 // pred_check_branch
        %1842 = sbr.rel (%p1840) target = $region60
      $region59: #{tpu_custom_call.1} parent=5 // pred_region
        %s1843 = ssub.s32 %s17, 2
        // Predicated region
        $region61: #{tpu_custom_call.1} parent=59 // pred_check
          %p1844 = pneg %p252
        $region62: #{tpu_custom_call.1} parent=59 // pred_check_branch
          %1846 = sbr.rel (%p1844) target = $region64
        $region63: #{tpu_custom_call.1} parent=59 // pred_region
          %s1847 = sand.u32 %s237, 1
          %s1848 = scalar_lea.sflag [#allocation3], %s1847
          %s1849 = sand.u32 %s237, 1
          %s1850 = smul.addr %s1849, 8
          %s1851 = scalar_lea.vmem [#allocation2], %s1850
          %1852 = dma.done %s1848, 128
        $region64: #{tpu_custom_call.1} parent=59 // pred_fallthru
          _
      $region60: #{tpu_custom_call.1} parent=5 // pred_fallthru
        _
    $region6: #{tpu_custom_call.1} parent=1 // loop_footer
      %s21 = sadd.s32 1, %s17
    $region7: #{tpu_custom_call.1} parent=1 // loop_footer_branch
      %16 = sbr.rel target = $region3
    $region8: #{tpu_custom_call.1} parent=1 // loop_exit
      _
    %1853 = vsyncpa [#allocation3], 1
    %s1854 = scalar_lea.sflag [#allocation3], 1
    %1855 = vsyncpa %s1854, 1

</llo_original>
